<compile_context>
chip_gen: v6e
topology: v6e:2x2x1
jax: 0.10.0
libtpu: 0.0.40
codegen_flags: <defaults>
</compile_context>

<pallas_src>
import jax
import jax.numpy as jnp
from jax.experimental import pallas as pl
from jax.experimental.pallas import tpu as pltpu

INPUT_SIZE = 6
HIDDEN_DIM = 64
NUM_LAYERS = 2               # hard-wired to 2 below (matches the module)
DROPOUT = 0.2                # nn.LSTM dropout is identity in eval/inference mode
WEIGHT_DTYPE = jnp.bfloat16  # MXU-native; gate math / cell state stay f32


def lstm_kernel(x_ref,       # (T*Bp, Ip)  time-major, rows t*Bp:(t+1)*Bp = step t, bf16
                w_ih0_ref,   # (Ip, 8H)    layer-0 input weights, interleaved cols, bf16
                b_full_ref,  # (1, 8H)     both layers' summed biases, interleaved, f32
                w_fused_ref, # (2H, 8H)    [[W_hh0, W_ih1],[0, W_hh1]] interleaved, bf16
                w_fc_ref,    # (1, 2H)     fc weights in lanes H:2H, zeros in 0:H, f32
                b_fc_ref,    # (1, 1)      fc bias, f32
                out_ref,     # (Bp, 1)     f32
                xw_ref):     # (T*Bp, 8H)  VMEM scratch for the hoisted projection
    Bp = out_ref.shape[0]
    T = x_ref.shape[0] // Bp
    G2 = w_fused_ref.shape[0]          # 2H = 128 (combined [layer0|layer1] lane width)
    H = G2 // 2
    wdt = w_fused_ref.dtype

    b_full = b_full_ref[...]           # (1, 8H), gate-prescaled, both layers

    # Hoisted layer-0 input projection for ALL timesteps (+ both layers' biases):
    # one off-critical-path MXU matmul, parked in VMEM scratch so the (T*Bp,8H)
    # intermediate does not pin ~32 vregs across the unrolled recurrence.
    xw_ref[...] = jnp.dot(x_ref[...], w_ih0_ref[...],
                          preferred_element_type=jnp.float32) + b_full

    def gate_act(gates):               # (Bp, 8H); i/f/o columns prescaled by 0.5
        t = jnp.tanh(gates)            # ONE EUP pass for both layers' 8 gate blocks
        s = 0.5 * t + 0.5              # sigmoid(x) = 0.5*tanh(x/2) + 0.5
        return (s[:, 0:G2], s[:, G2:2 * G2], t[:, 2 * G2:3 * G2], s[:, 3 * G2:4 * G2])

    # Combined state tiles (Bp, 2H): lanes 0:H = layer 0, lanes H:2H = layer 1.
    lane = jax.lax.broadcasted_iota(jnp.int32, (Bp, G2), 1)
    is_l0 = lane < H

    # ---- prologue (t = 0): h_comb == 0, so the recurrent matmul vanishes; only
    # the layer-0 half of the state is committed (layer-1 step -1 does not exist).
    i, f, g, o = gate_act(xw_ref[0:Bp, :])
    c = jnp.where(is_l0, i * g, 0.0)
    h = jnp.where(is_l0, o * jnp.tanh(c), 0.0)

    # ---- fused steps t = 1..T-1 (one-step layer skew): a single matmul + a single
    # tanh computes layer-0 step t and layer-1 step t-1; the combined [h0|h1] tile
    # produced here is exactly the next step's LHS (no concat, no lane shuffle).
    # TODO(synk): optionally stage w_fused in the MXU via pltpu.matmul_push_rhs /
    # matmul_acc_lhs to drop the per-step RHS push (kept as jnp.dot for robustness).
    for t in range(1, T):
        gates = xw_ref[t * Bp:(t + 1) * Bp, :] + jnp.dot(
            h.astype(wdt), w_fused_ref[...], preferred_element_type=jnp.float32)
        i, f, g, o = gate_act(gates)
        c = f * c + i * g
        h = o * jnp.tanh(c)

    # ---- epilogue: layer-1 step T-1 (layer-0 half is don't-care: no x for step T,
    # values stay bounded by tanh/sigmoid and are zeroed by the fc weight padding).
    gates = b_full + jnp.dot(h.astype(wdt), w_fused_ref[...],
                             preferred_element_type=jnp.float32)
    i, f, g, o = gate_act(gates)
    c = f * c + i * g
    h = o * jnp.tanh(c)

    # fc head: weights live only in the layer-1 lanes -> VPU multiply + lane reduce
    # (avoids an MXU push/drain for a 1-column result and any cross-lane extraction).
    out_ref[...] = (jnp.sum(h * w_fc_ref[...], axis=-1, keepdims=True)
                    + b_fc_ref[...])


def lstm_model_forward(x, kparams):
    """x: (B, T, INPUT_SIZE) float32, batch_first like the PyTorch module."""
    B, T, I = x.shape
    H = HIDDEN_DIM
    Bp = ((B + 7) // 8) * 8        # pad batch to the f32 sublane tile (free on MXU)
    Ip = 8                         # pad features so the hoisted matmul K dim is tiled

    # time-major, zero-padded, pre-cast to bf16, flattened to (T*Bp, Ip)
    x_tm = jnp.transpose(x, (1, 0, 2))
    x_tm = jnp.pad(x_tm, ((0, 0), (0, Bp - B), (0, Ip - I)))
    x_tm = x_tm.reshape(T * Bp, Ip).astype(WEIGHT_DTYPE)

    vmem = pl.BlockSpec(memory_space=pltpu.MemorySpace.VMEM)
    out = pl.pallas_call(
        lstm_kernel,
        out_shape=jax.ShapeDtypeStruct((Bp, 1), jnp.float32),
        in_specs=[vmem] * (1 + len(kparams)),
        out_specs=vmem,
        scratch_shapes=[pltpu.VMEM((T * Bp, 8 * H), jnp.float32)],
        # Gridless: total footprint ~0.3 MiB (fits every generation's VMEM easily).
        # To scale throughput, batch more sequences into one call (rows are free up
        # to ~128/256) rather than adding a grid; a parallel batch grid for v7x's
        # 2 TensorCores only pays once the batch outgrows a single call.
    )(x_tm, *kparams)

    return jnp.squeeze(out[:B, 0])       # matches torch .squeeze()


def init_params(key):
    """Deterministic synthetic params with exact PyTorch LSTM/Linear shapes."""
    H, I = HIDDEN_DIM, INPUT_SIZE
    k = 1.0 / jnp.sqrt(jnp.float32(H))
    keys = jax.random.split(key, 10)

    def u(kk, shape):
        return jax.random.uniform(kk, shape, jnp.float32, minval=-k, maxval=k)

    return dict(
        weight_ih_l0=u(keys[0], (4 * H, I)),
        weight_hh_l0=u(keys[1], (4 * H, H)),
        bias_ih_l0=u(keys[2], (4 * H,)),
        bias_hh_l0=u(keys[3], (4 * H,)),
        weight_ih_l1=u(keys[4], (4 * H, H)),
        weight_hh_l1=u(keys[5], (4 * H, H)),
        bias_ih_l1=u(keys[6], (4 * H,)),
        bias_hh_l1=u(keys[7], (4 * H,)),
        fc_weight=u(keys[8], (1, H)),
        fc_bias=u(keys[9], (1,)),
    )


def prepare_params(p, weight_dtype=WEIGHT_DTYPE):
    """PyTorch layout -> kernel layout.

    Column layout of every 8H-wide gate tensor (each block is 64 lanes):
        [i_l0 | i_l1 | f_l0 | f_l1 | g_l0 | g_l1 | o_l0 | o_l1]
    so every gate slice and the combined [layer0|layer1] state tile are 128-lane
    aligned. i/f/o columns are pre-scaled by 0.5 (exact power of two, before the
    bf16 cast) for the sigmoid-via-tanh trick.
    """
    H = HIDDEN_DIM
    Ip = 8

    def interleave(m0, m1):
        # m0 -> layer-0 gate columns, m1 -> layer-1 gate columns; both (rows, 4H)
        # in PyTorch [i|f|g|o] order; returns (rows, 8H) in the interleaved layout.
        cols = []
        for q in range(4):
            cols.append(m0[:, q * H:(q + 1) * H])
            cols.append(m1[:, q * H:(q + 1) * H])
        return jnp.concatenate(cols, axis=1)

    scale = jnp.concatenate([
        jnp.full((2 * H,), 0.5, jnp.float32),   # i (both layers)
        jnp.full((2 * H,), 0.5, jnp.float32),   # f
        jnp.ones((2 * H,), jnp.float32),        # g (tanh gate: unscaled)
        jnp.full((2 * H,), 0.5, jnp.float32),   # o
    ])

    # layer-0 input projection: rows padded I -> 8, layer-1 gate columns are zero
    w_ih0 = p["weight_ih_l0"].T                                     # (I, 4H)
    w_ih0 = jnp.pad(w_ih0, ((0, Ip - w_ih0.shape[0]), (0, 0)))      # (8, 4H)
    w_ih0_full = (interleave(w_ih0, jnp.zeros_like(w_ih0)) * scale
                  ).astype(weight_dtype)                            # (8, 8H)

    # fused recurrent weights: rows 0:H multiply h0 (W_hh0 for layer-0 gates,
    # W_ih1 for layer-1 gates), rows H:2H multiply h1 (W_hh1 for layer-1 gates).
    top = interleave(p["weight_hh_l0"].T, p["weight_ih_l1"].T)      # (H, 8H)
    bot = interleave(jnp.zeros((H, 4 * H), jnp.float32), p["weight_hh_l1"].T)
    w_fused = (jnp.concatenate([top, bot], axis=0) * scale
               ).astype(weight_dtype)                               # (2H, 8H)

    b0 = (p["bias_ih_l0"] + p["bias_hh_l0"]).reshape(1, 4 * H)
    b1 = (p["bias_ih_l1"] + p["bias_hh_l1"]).reshape(1, 4 * H)
    b_full = (interleave(b0, b1) * scale).astype(jnp.float32)       # (1, 8H)

    # fc weights live in the layer-1 half of the combined state tile
    w_fc = jnp.concatenate([jnp.zeros((1, H), jnp.float32),
                            p["fc_weight"].astype(jnp.float32)], axis=1)  # (1, 2H)
    b_fc = p["fc_bias"].reshape(1, 1).astype(jnp.float32)

    return (w_ih0_full, b_full, w_fused, w_fc, b_fc)


def lstm_reference(x, p):
    """Pure-JAX float32 reference of the PyTorch module (eval mode, dropout=identity)."""
    B, T, _ = x.shape
    H = HIDDEN_DIM

    def cell(xt, h, c, w_ih, w_hh, b_ih, b_hh):
        gates = xt @ w_ih.T + b_ih + h @ w_hh.T + b_hh
        i, f, g, o = jnp.split(gates, 4, axis=-1)
        i, f, o = jax.nn.sigmoid(i), jax.nn.sigmoid(f), jax.nn.sigmoid(o)
        g = jnp.tanh(g)
        c = f * c + i * g
        return o * jnp.tanh(c), c

    h0 = c0 = h1 = c1 = jnp.zeros((B, H), jnp.float32)
    for t in range(T):
        h0, c0 = cell(x[:, t, :], h0, c0, p["weight_ih_l0"], p["weight_hh_l0"],
                      p["bias_ih_l0"], p["bias_hh_l0"])
        # TODO(synk): inter-layer dropout (p=0.2) is identity in eval/inference mode
        h1, c1 = cell(h0, h1, c1, p["weight_ih_l1"], p["weight_hh_l1"],
                      p["bias_ih_l1"], p["bias_hh_l1"])
    return jnp.squeeze(h1 @ p["fc_weight"].T + p["fc_bias"])


if __name__ == "__main__":
    key = jax.random.PRNGKey(0)
    k_param, k_x = jax.random.split(key)

    B, T = 2, 8
    x = jax.random.normal(k_x, (B, T, INPUT_SIZE), dtype=jnp.float32)
    params = init_params(k_param)
    kparams = prepare_params(params)

    out = jax.block_until_ready(lstm_model_forward(x, kparams))
    assert out.shape == (B,), out.shape

    # structural-correctness check vs f32 reference (loose tol absorbs bf16 drift)
    ref = lstm_reference(x, params)
    assert jnp.allclose(out, ref, rtol=0.0, atol=1e-1), (out, ref)

    print("KERNEL_OK")
</pallas_src>

<mosaic_0001>
module attributes {stable_mosaic.version = 11 : i64} {
  func.func @lstm_kernel(%arg0: memref<64x8xbf16, #tpu.memory_space<vmem>>, %arg1: memref<8x512xbf16, #tpu.memory_space<vmem>>, %arg2: memref<1x512xf32, #tpu.memory_space<vmem>>, %arg3: memref<128x512xbf16, #tpu.memory_space<vmem>>, %arg4: memref<1x128xf32, #tpu.memory_space<vmem>>, %arg5: memref<1x1xf32, #tpu.memory_space<vmem>>, %arg6: memref<8x1xf32, #tpu.memory_space<vmem>>, %arg7: memref<64x512xf32, #tpu.memory_space<vmem>>) attributes {dimension_semantics = [], scalar_prefetch = 0 : i64, scratch_operands = 1 : i64, tpu.core_type = #tpu.core_type<tc>} {
    %c0 = arith.constant 0 : index
    %c0_0 = arith.constant 0 : index
    %0 = vector.load %arg2[%c0, %c0_0] : memref<1x512xf32, #tpu.memory_space<vmem>>, vector<1x512xf32>
    %c0_1 = arith.constant 0 : index
    %c0_2 = arith.constant 0 : index
    %1 = vector.load %arg0[%c0_1, %c0_2] : memref<64x8xbf16, #tpu.memory_space<vmem>>, vector<64x8xbf16>
    %c0_3 = arith.constant 0 : index
    %c0_4 = arith.constant 0 : index
    %2 = vector.load %arg1[%c0_3, %c0_4] : memref<8x512xbf16, #tpu.memory_space<vmem>>, vector<8x512xbf16>
    %cst = arith.constant dense<0.000000e+00> : vector<64x512xf32>
    %3 = tpu.matmul %1, %2, %cst {dimension_numbers = #tpu.dot_dimension_numbers<[1], [0], [0], [1], [0, 0, 1, 1], [], []>} : vector<64x8xbf16>, vector<8x512xbf16>, vector<64x512xf32> -> vector<64x512xf32>
    %4 = vector.broadcast %0 : vector<1x512xf32> to vector<64x512xf32>
    %5 = arith.addf %3, %4 : vector<64x512xf32>
    %c0_5 = arith.constant 0 : index
    %c0_6 = arith.constant 0 : index
    %6 = vector.load %arg7[%c0_5, %c0_6] : memref<64x512xf32, #tpu.memory_space<vmem>>, vector<64x512xf32>
    tpu.vector_store %arg7[%c0_5, %c0_6], %5 {strides = array<i32>} : memref<64x512xf32, #tpu.memory_space<vmem>>, vector<64x512xf32>,
    %7 = tpu.iota {dimensions = array<i32: 1>} : vector<8x128xi32>
    %c64_i32 = arith.constant 64 : i32
    %8 = vector.broadcast %c64_i32 : i32 to vector<8x128xi32>
    %9 = arith.cmpi slt, %7, %8 : vector<8x128xi32>
    %c0_7 = arith.constant 0 : index
    %c0_8 = arith.constant 0 : index
    %10 = vector.load %arg7[%c0_7, %c0_8] : memref<64x512xf32, #tpu.memory_space<vmem>>, vector<8x512xf32>
    %11 = math.tanh %10 : vector<8x512xf32>
    %cst_9 = arith.constant 5.000000e-01 : f32
    %12 = vector.broadcast %cst_9 : f32 to vector<8x512xf32>
    %13 = arith.mulf %12, %11 : vector<8x512xf32>
    %cst_10 = arith.constant 5.000000e-01 : f32
    %14 = vector.broadcast %cst_10 : f32 to vector<8x512xf32>
    %15 = arith.addf %13, %14 : vector<8x512xf32>
    %16 = vector.extract_strided_slice %15 {offsets = [0, 0], sizes = [8, 128], strides = [1, 1]} : vector<8x512xf32> to vector<8x128xf32>
    %17 = vector.extract_strided_slice %11 {offsets = [0, 256], sizes = [8, 128], strides = [1, 1]} : vector<8x512xf32> to vector<8x128xf32>
    %18 = vector.extract_strided_slice %15 {offsets = [0, 384], sizes = [8, 128], strides = [1, 1]} : vector<8x512xf32> to vector<8x128xf32>
    %19 = arith.mulf %16, %17 : vector<8x128xf32>
    %cst_11 = arith.constant 0.000000e+00 : f32
    %20 = vector.broadcast %cst_11 : f32 to vector<8x128xf32>
    %21 = arith.select %9, %19, %20 : vector<8x128xi1>, vector<8x128xf32>
    %22 = math.tanh %21 : vector<8x128xf32>
    %23 = arith.mulf %18, %22 : vector<8x128xf32>
    %cst_12 = arith.constant 0.000000e+00 : f32
    %24 = vector.broadcast %cst_12 : f32 to vector<8x128xf32>
    %25 = arith.select %9, %23, %24 : vector<8x128xi1>, vector<8x128xf32>
    %c8 = arith.constant 8 : index
    %c0_13 = arith.constant 0 : index
    %26 = vector.load %arg7[%c8, %c0_13] : memref<64x512xf32, #tpu.memory_space<vmem>>, vector<8x512xf32>
    %27 = arith.truncf %25 : vector<8x128xf32> to vector<8x128xbf16>
    %c0_14 = arith.constant 0 : index
    %c0_15 = arith.constant 0 : index
    %28 = vector.load %arg3[%c0_14, %c0_15] : memref<128x512xbf16, #tpu.memory_space<vmem>>, vector<128x512xbf16>
    %cst_16 = arith.constant dense<0.000000e+00> : vector<8x512xf32>
    %29 = tpu.matmul %27, %28, %cst_16 {dimension_numbers = #tpu.dot_dimension_numbers<[1], [0], [0], [1], [0, 0, 1, 1], [], []>} : vector<8x128xbf16>, vector<128x512xbf16>, vector<8x512xf32> -> vector<8x512xf32>
    %30 = arith.addf %26, %29 : vector<8x512xf32>
    %31 = math.tanh %30 : vector<8x512xf32>
    %cst_17 = arith.constant 5.000000e-01 : f32
    %32 = vector.broadcast %cst_17 : f32 to vector<8x512xf32>
    %33 = arith.mulf %32, %31 : vector<8x512xf32>
    %cst_18 = arith.constant 5.000000e-01 : f32
    %34 = vector.broadcast %cst_18 : f32 to vector<8x512xf32>
    %35 = arith.addf %33, %34 : vector<8x512xf32>
    %36 = vector.extract_strided_slice %35 {offsets = [0, 0], sizes = [8, 128], strides = [1, 1]} : vector<8x512xf32> to vector<8x128xf32>
    %37 = vector.extract_strided_slice %35 {offsets = [0, 128], sizes = [8, 128], strides = [1, 1]} : vector<8x512xf32> to vector<8x128xf32>
    %38 = vector.extract_strided_slice %31 {offsets = [0, 256], sizes = [8, 128], strides = [1, 1]} : vector<8x512xf32> to vector<8x128xf32>
    %39 = vector.extract_strided_slice %35 {offsets = [0, 384], sizes = [8, 128], strides = [1, 1]} : vector<8x512xf32> to vector<8x128xf32>
    %40 = arith.mulf %37, %21 : vector<8x128xf32>
    %41 = arith.mulf %36, %38 : vector<8x128xf32>
    %42 = arith.addf %40, %41 : vector<8x128xf32>
    %43 = math.tanh %42 : vector<8x128xf32>
    %44 = arith.mulf %39, %43 : vector<8x128xf32>
    %c16 = arith.constant 16 : index
    %c0_19 = arith.constant 0 : index
    %45 = vector.load %arg7[%c16, %c0_19] : memref<64x512xf32, #tpu.memory_space<vmem>>, vector<8x512xf32>
    %46 = arith.truncf %44 : vector<8x128xf32> to vector<8x128xbf16>
    %c0_20 = arith.constant 0 : index
    %c0_21 = arith.constant 0 : index
    %47 = vector.load %arg3[%c0_20, %c0_21] : memref<128x512xbf16, #tpu.memory_space<vmem>>, vector<128x512xbf16>
    %cst_22 = arith.constant dense<0.000000e+00> : vector<8x512xf32>
    %48 = tpu.matmul %46, %47, %cst_22 {dimension_numbers = #tpu.dot_dimension_numbers<[1], [0], [0], [1], [0, 0, 1, 1], [], []>} : vector<8x128xbf16>, vector<128x512xbf16>, vector<8x512xf32> -> vector<8x512xf32>
    %49 = arith.addf %45, %48 : vector<8x512xf32>
    %50 = math.tanh %49 : vector<8x512xf32>
    %cst_23 = arith.constant 5.000000e-01 : f32
    %51 = vector.broadcast %cst_23 : f32 to vector<8x512xf32>
    %52 = arith.mulf %51, %50 : vector<8x512xf32>
    %cst_24 = arith.constant 5.000000e-01 : f32
    %53 = vector.broadcast %cst_24 : f32 to vector<8x512xf32>
    %54 = arith.addf %52, %53 : vector<8x512xf32>
    %55 = vector.extract_strided_slice %54 {offsets = [0, 0], sizes = [8, 128], strides = [1, 1]} : vector<8x512xf32> to vector<8x128xf32>
    %56 = vector.extract_strided_slice %54 {offsets = [0, 128], sizes = [8, 128], strides = [1, 1]} : vector<8x512xf32> to vector<8x128xf32>
    %57 = vector.extract_strided_slice %50 {offsets = [0, 256], sizes = [8, 128], strides = [1, 1]} : vector<8x512xf32> to vector<8x128xf32>
    %58 = vector.extract_strided_slice %54 {offsets = [0, 384], sizes = [8, 128], strides = [1, 1]} : vector<8x512xf32> to vector<8x128xf32>
    %59 = arith.mulf %56, %42 : vector<8x128xf32>
    %60 = arith.mulf %55, %57 : vector<8x128xf32>
    %61 = arith.addf %59, %60 : vector<8x128xf32>
    %62 = math.tanh %61 : vector<8x128xf32>
    %63 = arith.mulf %58, %62 : vector<8x128xf32>
    %c24 = arith.constant 24 : index
    %c0_25 = arith.constant 0 : index
    %64 = vector.load %arg7[%c24, %c0_25] : memref<64x512xf32, #tpu.memory_space<vmem>>, vector<8x512xf32>
    %65 = arith.truncf %63 : vector<8x128xf32> to vector<8x128xbf16>
    %c0_26 = arith.constant 0 : index
    %c0_27 = arith.constant 0 : index
    %66 = vector.load %arg3[%c0_26, %c0_27] : memref<128x512xbf16, #tpu.memory_space<vmem>>, vector<128x512xbf16>
    %cst_28 = arith.constant dense<0.000000e+00> : vector<8x512xf32>
    %67 = tpu.matmul %65, %66, %cst_28 {dimension_numbers = #tpu.dot_dimension_numbers<[1], [0], [0], [1], [0, 0, 1, 1], [], []>} : vector<8x128xbf16>, vector<128x512xbf16>, vector<8x512xf32> -> vector<8x512xf32>
    %68 = arith.addf %64, %67 : vector<8x512xf32>
    %69 = math.tanh %68 : vector<8x512xf32>
    %cst_29 = arith.constant 5.000000e-01 : f32
    %70 = vector.broadcast %cst_29 : f32 to vector<8x512xf32>
    %71 = arith.mulf %70, %69 : vector<8x512xf32>
    %cst_30 = arith.constant 5.000000e-01 : f32
    %72 = vector.broadcast %cst_30 : f32 to vector<8x512xf32>
    %73 = arith.addf %71, %72 : vector<8x512xf32>
    %74 = vector.extract_strided_slice %73 {offsets = [0, 0], sizes = [8, 128], strides = [1, 1]} : vector<8x512xf32> to vector<8x128xf32>
    %75 = vector.extract_strided_slice %73 {offsets = [0, 128], sizes = [8, 128], strides = [1, 1]} : vector<8x512xf32> to vector<8x128xf32>
    %76 = vector.extract_strided_slice %69 {offsets = [0, 256], sizes = [8, 128], strides = [1, 1]} : vector<8x512xf32> to vector<8x128xf32>
    %77 = vector.extract_strided_slice %73 {offsets = [0, 384], sizes = [8, 128], strides = [1, 1]} : vector<8x512xf32> to vector<8x128xf32>
    %78 = arith.mulf %75, %61 : vector<8x128xf32>
    %79 = arith.mulf %74, %76 : vector<8x128xf32>
    %80 = arith.addf %78, %79 : vector<8x128xf32>
    %81 = math.tanh %80 : vector<8x128xf32>
    %82 = arith.mulf %77, %81 : vector<8x128xf32>
    %c32 = arith.constant 32 : index
    %c0_31 = arith.constant 0 : index
    %83 = vector.load %arg7[%c32, %c0_31] : memref<64x512xf32, #tpu.memory_space<vmem>>, vector<8x512xf32>
    %84 = arith.truncf %82 : vector<8x128xf32> to vector<8x128xbf16>
    %c0_32 = arith.constant 0 : index
    %c0_33 = arith.constant 0 : index
    %85 = vector.load %arg3[%c0_32, %c0_33] : memref<128x512xbf16, #tpu.memory_space<vmem>>, vector<128x512xbf16>
    %cst_34 = arith.constant dense<0.000000e+00> : vector<8x512xf32>
    %86 = tpu.matmul %84, %85, %cst_34 {dimension_numbers = #tpu.dot_dimension_numbers<[1], [0], [0], [1], [0, 0, 1, 1], [], []>} : vector<8x128xbf16>, vector<128x512xbf16>, vector<8x512xf32> -> vector<8x512xf32>
    %87 = arith.addf %83, %86 : vector<8x512xf32>
    %88 = math.tanh %87 : vector<8x512xf32>
    %cst_35 = arith.constant 5.000000e-01 : f32
    %89 = vector.broadcast %cst_35 : f32 to vector<8x512xf32>
    %90 = arith.mulf %89, %88 : vector<8x512xf32>
    %cst_36 = arith.constant 5.000000e-01 : f32
    %91 = vector.broadcast %cst_36 : f32 to vector<8x512xf32>
    %92 = arith.addf %90, %91 : vector<8x512xf32>
    %93 = vector.extract_strided_slice %92 {offsets = [0, 0], sizes = [8, 128], strides = [1, 1]} : vector<8x512xf32> to vector<8x128xf32>
    %94 = vector.extract_strided_slice %92 {offsets = [0, 128], sizes = [8, 128], strides = [1, 1]} : vector<8x512xf32> to vector<8x128xf32>
    %95 = vector.extract_strided_slice %88 {offsets = [0, 256], sizes = [8, 128], strides = [1, 1]} : vector<8x512xf32> to vector<8x128xf32>
    %96 = vector.extract_strided_slice %92 {offsets = [0, 384], sizes = [8, 128], strides = [1, 1]} : vector<8x512xf32> to vector<8x128xf32>
    %97 = arith.mulf %94, %80 : vector<8x128xf32>
    %98 = arith.mulf %93, %95 : vector<8x128xf32>
    %99 = arith.addf %97, %98 : vector<8x128xf32>
    %100 = math.tanh %99 : vector<8x128xf32>
    %101 = arith.mulf %96, %100 : vector<8x128xf32>
    %c40 = arith.constant 40 : index
    %c0_37 = arith.constant 0 : index
    %102 = vector.load %arg7[%c40, %c0_37] : memref<64x512xf32, #tpu.memory_space<vmem>>, vector<8x512xf32>
    %103 = arith.truncf %101 : vector<8x128xf32> to vector<8x128xbf16>
    %c0_38 = arith.constant 0 : index
    %c0_39 = arith.constant 0 : index
    %104 = vector.load %arg3[%c0_38, %c0_39] : memref<128x512xbf16, #tpu.memory_space<vmem>>, vector<128x512xbf16>
    %cst_40 = arith.constant dense<0.000000e+00> : vector<8x512xf32>
    %105 = tpu.matmul %103, %104, %cst_40 {dimension_numbers = #tpu.dot_dimension_numbers<[1], [0], [0], [1], [0, 0, 1, 1], [], []>} : vector<8x128xbf16>, vector<128x512xbf16>, vector<8x512xf32> -> vector<8x512xf32>
    %106 = arith.addf %102, %105 : vector<8x512xf32>
    %107 = math.tanh %106 : vector<8x512xf32>
    %cst_41 = arith.constant 5.000000e-01 : f32
    %108 = vector.broadcast %cst_41 : f32 to vector<8x512xf32>
    %109 = arith.mulf %108, %107 : vector<8x512xf32>
    %cst_42 = arith.constant 5.000000e-01 : f32
    %110 = vector.broadcast %cst_42 : f32 to vector<8x512xf32>
    %111 = arith.addf %109, %110 : vector<8x512xf32>
    %112 = vector.extract_strided_slice %111 {offsets = [0, 0], sizes = [8, 128], strides = [1, 1]} : vector<8x512xf32> to vector<8x128xf32>
    %113 = vector.extract_strided_slice %111 {offsets = [0, 128], sizes = [8, 128], strides = [1, 1]} : vector<8x512xf32> to vector<8x128xf32>
    %114 = vector.extract_strided_slice %107 {offsets = [0, 256], sizes = [8, 128], strides = [1, 1]} : vector<8x512xf32> to vector<8x128xf32>
    %115 = vector.extract_strided_slice %111 {offsets = [0, 384], sizes = [8, 128], strides = [1, 1]} : vector<8x512xf32> to vector<8x128xf32>
    %116 = arith.mulf %113, %99 : vector<8x128xf32>
    %117 = arith.mulf %112, %114 : vector<8x128xf32>
    %118 = arith.addf %116, %117 : vector<8x128xf32>
    %119 = math.tanh %118 : vector<8x128xf32>
    %120 = arith.mulf %115, %119 : vector<8x128xf32>
    %c48 = arith.constant 48 : index
    %c0_43 = arith.constant 0 : index
    %121 = vector.load %arg7[%c48, %c0_43] : memref<64x512xf32, #tpu.memory_space<vmem>>, vector<8x512xf32>
    %122 = arith.truncf %120 : vector<8x128xf32> to vector<8x128xbf16>
    %c0_44 = arith.constant 0 : index
    %c0_45 = arith.constant 0 : index
    %123 = vector.load %arg3[%c0_44, %c0_45] : memref<128x512xbf16, #tpu.memory_space<vmem>>, vector<128x512xbf16>
    %cst_46 = arith.constant dense<0.000000e+00> : vector<8x512xf32>
    %124 = tpu.matmul %122, %123, %cst_46 {dimension_numbers = #tpu.dot_dimension_numbers<[1], [0], [0], [1], [0, 0, 1, 1], [], []>} : vector<8x128xbf16>, vector<128x512xbf16>, vector<8x512xf32> -> vector<8x512xf32>
    %125 = arith.addf %121, %124 : vector<8x512xf32>
    %126 = math.tanh %125 : vector<8x512xf32>
    %cst_47 = arith.constant 5.000000e-01 : f32
    %127 = vector.broadcast %cst_47 : f32 to vector<8x512xf32>
    %128 = arith.mulf %127, %126 : vector<8x512xf32>
    %cst_48 = arith.constant 5.000000e-01 : f32
    %129 = vector.broadcast %cst_48 : f32 to vector<8x512xf32>
    %130 = arith.addf %128, %129 : vector<8x512xf32>
    %131 = vector.extract_strided_slice %130 {offsets = [0, 0], sizes = [8, 128], strides = [1, 1]} : vector<8x512xf32> to vector<8x128xf32>
    %132 = vector.extract_strided_slice %130 {offsets = [0, 128], sizes = [8, 128], strides = [1, 1]} : vector<8x512xf32> to vector<8x128xf32>
    %133 = vector.extract_strided_slice %126 {offsets = [0, 256], sizes = [8, 128], strides = [1, 1]} : vector<8x512xf32> to vector<8x128xf32>
    %134 = vector.extract_strided_slice %130 {offsets = [0, 384], sizes = [8, 128], strides = [1, 1]} : vector<8x512xf32> to vector<8x128xf32>
    %135 = arith.mulf %132, %118 : vector<8x128xf32>
    %136 = arith.mulf %131, %133 : vector<8x128xf32>
    %137 = arith.addf %135, %136 : vector<8x128xf32>
    %138 = math.tanh %137 : vector<8x128xf32>
    %139 = arith.mulf %134, %138 : vector<8x128xf32>
    %c56 = arith.constant 56 : index
    %c0_49 = arith.constant 0 : index
    %140 = vector.load %arg7[%c56, %c0_49] : memref<64x512xf32, #tpu.memory_space<vmem>>, vector<8x512xf32>
    %141 = arith.truncf %139 : vector<8x128xf32> to vector<8x128xbf16>
    %c0_50 = arith.constant 0 : index
    %c0_51 = arith.constant 0 : index
    %142 = vector.load %arg3[%c0_50, %c0_51] : memref<128x512xbf16, #tpu.memory_space<vmem>>, vector<128x512xbf16>
    %cst_52 = arith.constant dense<0.000000e+00> : vector<8x512xf32>
    %143 = tpu.matmul %141, %142, %cst_52 {dimension_numbers = #tpu.dot_dimension_numbers<[1], [0], [0], [1], [0, 0, 1, 1], [], []>} : vector<8x128xbf16>, vector<128x512xbf16>, vector<8x512xf32> -> vector<8x512xf32>
    %144 = arith.addf %140, %143 : vector<8x512xf32>
    %145 = math.tanh %144 : vector<8x512xf32>
    %cst_53 = arith.constant 5.000000e-01 : f32
    %146 = vector.broadcast %cst_53 : f32 to vector<8x512xf32>
    %147 = arith.mulf %146, %145 : vector<8x512xf32>
    %cst_54 = arith.constant 5.000000e-01 : f32
    %148 = vector.broadcast %cst_54 : f32 to vector<8x512xf32>
    %149 = arith.addf %147, %148 : vector<8x512xf32>
    %150 = vector.extract_strided_slice %149 {offsets = [0, 0], sizes = [8, 128], strides = [1, 1]} : vector<8x512xf32> to vector<8x128xf32>
    %151 = vector.extract_strided_slice %149 {offsets = [0, 128], sizes = [8, 128], strides = [1, 1]} : vector<8x512xf32> to vector<8x128xf32>
    %152 = vector.extract_strided_slice %145 {offsets = [0, 256], sizes = [8, 128], strides = [1, 1]} : vector<8x512xf32> to vector<8x128xf32>
    %153 = vector.extract_strided_slice %149 {offsets = [0, 384], sizes = [8, 128], strides = [1, 1]} : vector<8x512xf32> to vector<8x128xf32>
    %154 = arith.mulf %151, %137 : vector<8x128xf32>
    %155 = arith.mulf %150, %152 : vector<8x128xf32>
    %156 = arith.addf %154, %155 : vector<8x128xf32>
    %157 = math.tanh %156 : vector<8x128xf32>
    %158 = arith.mulf %153, %157 : vector<8x128xf32>
    %159 = arith.truncf %158 : vector<8x128xf32> to vector<8x128xbf16>
    %c0_55 = arith.constant 0 : index
    %c0_56 = arith.constant 0 : index
    %160 = vector.load %arg3[%c0_55, %c0_56] : memref<128x512xbf16, #tpu.memory_space<vmem>>, vector<128x512xbf16>
    %cst_57 = arith.constant dense<0.000000e+00> : vector<8x512xf32>
    %161 = tpu.matmul %159, %160, %cst_57 {dimension_numbers = #tpu.dot_dimension_numbers<[1], [0], [0], [1], [0, 0, 1, 1], [], []>} : vector<8x128xbf16>, vector<128x512xbf16>, vector<8x512xf32> -> vector<8x512xf32>
    %162 = vector.broadcast %0 : vector<1x512xf32> to vector<8x512xf32>
    %163 = arith.addf %162, %161 : vector<8x512xf32>
    %164 = math.tanh %163 : vector<8x512xf32>
    %cst_58 = arith.constant 5.000000e-01 : f32
    %165 = vector.broadcast %cst_58 : f32 to vector<8x512xf32>
    %166 = arith.mulf %165, %164 : vector<8x512xf32>
    %cst_59 = arith.constant 5.000000e-01 : f32
    %167 = vector.broadcast %cst_59 : f32 to vector<8x512xf32>
    %168 = arith.addf %166, %167 : vector<8x512xf32>
    %169 = vector.extract_strided_slice %168 {offsets = [0, 0], sizes = [8, 128], strides = [1, 1]} : vector<8x512xf32> to vector<8x128xf32>
    %170 = vector.extract_strided_slice %168 {offsets = [0, 128], sizes = [8, 128], strides = [1, 1]} : vector<8x512xf32> to vector<8x128xf32>
    %171 = vector.extract_strided_slice %164 {offsets = [0, 256], sizes = [8, 128], strides = [1, 1]} : vector<8x512xf32> to vector<8x128xf32>
    %172 = vector.extract_strided_slice %168 {offsets = [0, 384], sizes = [8, 128], strides = [1, 1]} : vector<8x512xf32> to vector<8x128xf32>
    %173 = arith.mulf %170, %156 : vector<8x128xf32>
    %174 = arith.mulf %169, %171 : vector<8x128xf32>
    %175 = arith.addf %173, %174 : vector<8x128xf32>
    %176 = math.tanh %175 : vector<8x128xf32>
    %177 = arith.mulf %172, %176 : vector<8x128xf32>
    %c0_60 = arith.constant 0 : index
    %c0_61 = arith.constant 0 : index
    %178 = vector.load %arg4[%c0_60, %c0_61] : memref<1x128xf32, #tpu.memory_space<vmem>>, vector<1x128xf32>
    %179 = vector.broadcast %178 : vector<1x128xf32> to vector<8x128xf32>
    %180 = arith.mulf %177, %179 : vector<8x128xf32>
    %cst_62 = arith.constant dense<0.000000e+00> : vector<8xf32>
    %181 = vector.multi_reduction <add>, %180, %cst_62 [1] : vector<8x128xf32> to vector<8xf32>
    %182 = vector.shape_cast %181 : vector<8xf32> to vector<8x1xf32>
    %c0_63 = arith.constant 0 : index
    %c0_64 = arith.constant 0 : index
    %183 = vector.load %arg5[%c0_63, %c0_64] : memref<1x1xf32, #tpu.memory_space<vmem>>, vector<1x1xf32>
    %184 = vector.broadcast %183 : vector<1x1xf32> to vector<8x1xf32>
    %185 = arith.addf %182, %184 : vector<8x1xf32>
    %c0_65 = arith.constant 0 : index
    %c0_66 = arith.constant 0 : index
    %186 = vector.load %arg6[%c0_65, %c0_66] : memref<8x1xf32, #tpu.memory_space<vmem>>, vector<8x1xf32>
    tpu.vector_store %arg6[%c0_65, %c0_66], %185 {strides = array<i32>} : memref<8x1xf32, #tpu.memory_space<vmem>>, vector<8x1xf32>,
    return
  }
}

</mosaic_0001>

<llo_original>
// kernel: tpu_custom_call.1
$region0: #{tpu_custom_call.1}
  #allocation0 [shape = 'u32[]', space=smem, size = 0x4, offset = 0x4, fixed_abs, tag = 'smem constant byte address 0x4 - core index']
  #allocation1 [shape = 'u32[144,128]{1,0:T(1,128)}', space=vmem, size = 0x12000, scoped, tag = 'internal scratch']
  #allocation2 [shape = 'f32[64,512]{1,0:T(8,128)}', space=vmem, size = 0x20000, scoped, tag = 'scratch operand']
  #allocation3 [shape = 'f32[1,1]{1,0:T(1,128)S(1)}', space=vmem, size = 0x200, scoped, tag = 'scoped memory for tpu_custom_call.1']
  %s0 = inlined_call_operand.vmem [shape: bf16[64,8], index: 0, kind: input, shape index: {}]
  %s1 = inlined_call_operand.vmem [shape: bf16[8,512], index: 1, kind: input, shape index: {}]
  %s2 = inlined_call_operand.vmem [shape: f32[1,512], index: 2, kind: input, shape index: {}]
  %s3 = inlined_call_operand.hbm [shape: bf16[128,512], index: 3, kind: input, shape index: {}]
  %s4 = inlined_call_operand.vmem [shape: f32[1,128], index: 4, kind: input, shape index: {}]
  %s5 = inlined_call_operand.<no memory space> [shape: f32[1,1], index: 5, kind: input, shape index: {}]
  %s6 = inlined_call_operand.vmem [shape: f32[8,1], index: 6, kind: output, shape index: {}]
  %s7 = sld [smem:[#allocation0]]
  $region38: #{tpu_custom_call.1} parent=0
    _
  %s9 = ssub.s32 1, %s7
  %s10 = scalar_select 0, %s9, %s7
  %v11 = vstv %s5
  %12 = vst [vmem:[#allocation3] sm:$0x1] %v11
  $region1: #{tpu_custom_call.1} parent=0
    #allocation4 [shape = 'u8[131072]{0}', space=vmem, size = 0x20000, scoped, tag = 'input window, operand 3, single buffered']
    #allocation5 [shape = 's32[1]{0}', space=sflag, size = 0x4, scoped, tag = 'scoped memory for tpu_custom_call.1']
    %13 = vsyncpa [#allocation5], 0
    // Predicated region
    $region2: #{tpu_custom_call.1} parent=1 // pred_check
      _
    $region3: #{tpu_custom_call.1} parent=1 // pred_check_branch
      %15 = sbr.rel (0) target = $region5
    $region4: #{tpu_custom_call.1} parent=1 // pred_region
      _
    $region5: #{tpu_custom_call.1} parent=1 // pred_fallthru
      _
    // Predicated region
    $region6: #{tpu_custom_call.1} parent=1 // pred_check
      _
    $region7: #{tpu_custom_call.1} parent=1 // pred_check_branch
      %17 = sbr.rel (0) target = $region9
    $region8: #{tpu_custom_call.1} parent=1 // pred_region
      _
    $region9: #{tpu_custom_call.1} parent=1 // pred_fallthru
      _
    // Predicated region
    $region10: #{tpu_custom_call.1} parent=1 // pred_check
      _
    $region11: #{tpu_custom_call.1} parent=1 // pred_check_branch
      %19 = sbr.rel (0) target = $region13
    $region12: #{tpu_custom_call.1} parent=1 // pred_region
      _
    $region13: #{tpu_custom_call.1} parent=1 // pred_fallthru
      _
    // Predicated region
    $region14: #{tpu_custom_call.1} parent=1 // pred_check
      _
    $region15: #{tpu_custom_call.1} parent=1 // pred_check_branch
      %21 = sbr.rel (0) target = $region17
    $region16: #{tpu_custom_call.1} parent=1 // pred_region
      %s23 = ssub.s32 4096, 4096
      %24 = vsyncadd [#allocation5], %s23
      %s25 = sshll.u32 [#allocation4], 4
      %s26 = int_to_ptr.vmem [resolvable:$true] %s25
      %31 = dma.hbm_to_vmem [thread:$0]  %s3, 4096, %s26, [#allocation5], 256, 256, 16
    $region17: #{tpu_custom_call.1} parent=1 // pred_fallthru
      _
    // Predicated region
    $region18: #{tpu_custom_call.1} parent=1 // pred_check
      _
    $region19: #{tpu_custom_call.1} parent=1 // pred_check_branch
      %33 = sbr.rel (0) target = $region21
    $region20: #{tpu_custom_call.1} parent=1 // pred_region
      _
    $region21: #{tpu_custom_call.1} parent=1 // pred_fallthru
      _
    // Predicated region
    $region22: #{tpu_custom_call.1} parent=1 // pred_check
      _
    $region23: #{tpu_custom_call.1} parent=1 // pred_check_branch
      %35 = sbr.rel (0) target = $region25
    $region24: #{tpu_custom_call.1} parent=1 // pred_region
      _
    $region25: #{tpu_custom_call.1} parent=1 // pred_fallthru
      _
    // Predicated region
    $region26: #{tpu_custom_call.1} parent=1 // pred_check
      _
    $region27: #{tpu_custom_call.1} parent=1 // pred_check_branch
      %37 = sbr.rel (0) target = $region29
    $region28: #{tpu_custom_call.1} parent=1 // pred_region
      %38 = dma.done [#allocation5], 4096
    $region29: #{tpu_custom_call.1} parent=1 // pred_fallthru
      _
    %v40 = vld [vmem:[%s2] sm:$0xf]
    %v41 = vld [vmem:[%s0] sm:$0xf]
    %v42 = vld [vmem:[%s0 + $0x4] sm:$0xf]
    %v43 = vld [vmem:[%s0 + $0x8] sm:$0xf]
    %v44 = vld [vmem:[%s0 + $0xc] sm:$0xf]
    %v45 = vld [vmem:[%s0 + $0x10] sm:$0xf]
    %v46 = vld [vmem:[%s0 + $0x14] sm:$0xf]
    %v47 = vld [vmem:[%s0 + $0x18] sm:$0xf]
    %v48 = vld [vmem:[%s0 + $0x1c] sm:$0xf]
    %v49 = vld [vmem:[%s1] sm:$0xff]
    %v50 = vld [vmem:[%s1 + $0x8] sm:$0xff]
    %v52 = vlaneseq
    %v53 = vshrl.u32 %v52, 7
    %v54 = vsub.s32 0, %v53
    %v55 = vrot.slane %v40, %v54
    %v56 = vlaneseq
    %v57 = vshrl.u32 %v56, 7
    %v58 = vsub.s32 1, %v57
    %v59 = vrot.slane %v40, %v58
    %v60 = vlaneseq
    %v61 = vshrl.u32 %v60, 7
    %v62 = vsub.s32 2, %v61
    %v63 = vrot.slane %v40, %v62
    %v64 = vlaneseq
    %v65 = vshrl.u32 %v64, 7
    %v66 = vsub.s32 3, %v65
    %v67 = vrot.slane %v40, %v66
    %v80 = vunpack.c.l.b16 %v41
    %v81 = vunpack.c.l.b16 %v42
    %v82 = vunpack.c.l.b16 %v43
    %v83 = vunpack.c.l.b16 %v44
    %v84 = vunpack.c.l.b16 %v45
    %v85 = vunpack.c.l.b16 %v46
    %v86 = vunpack.c.l.b16 %v47
    %v87 = vunpack.c.l.b16 %v48
    %v88 = vpack.c.b16 %v81, %v80
    %v89 = vpack.c.b16 %v83, %v82
    %v90 = vpack.c.b16 %v85, %v84
    %v91 = vpack.c.b16 %v87, %v86
    %v94 = vunpack.c.l.b16 %v49
    %v95 = vunpack.c.h.b16 %v49
    %v96 = vunpack.c.l.b16 %v50
    %v97 = vunpack.c.h.b16 %v50
    %v98 = vpack.c.b16 %v94, %v94
    %v99 = vpack.c.b16 %v95, %v95
    %v100 = vpack.c.b16 %v96, %v96
    %v101 = vpack.c.b16 %v97, %v97
    %vm102 = vcmask 64512
    %v104 = vsel %vm102, %v88, 0
    %v107 = vsel %vm102, %v89, 0
    %v110 = vsel %vm102, %v90, 0
    %v113 = vsel %vm102, %v91, 0
    %vm115 = vcmask 1043456
    %v117 = vsel %vm115, %v98, 0
    %v120 = vsel %vm115, %v99, 0
    %v123 = vsel %vm115, %v100, 0
    %v126 = vsel %vm115, %v101, 0
    %128 = vmatprep.subr.bf16.mxu0 0
    %129 = vmatpush1.bf16.msra.mxu0 0
    %130 = vmatprep.subr.bf16.mxu0 0
    %131 = vmatpush1.bf16.msra.mxu0 0
    %132 = vmatprep.subr.bf16.mxu0 0
    %133 = vmatpush1.bf16.msra.mxu0 0
    %134 = vmatprep.subr.bf16.mxu0 0
    %135 = vmatpush1.bf16.msra.mxu0 0
    %136 = vmatprep.subr.bf16.mxu0 0
    %137 = vmatpush1.bf16.msra.mxu0 0
    %138 = vmatprep.subr.bf16.mxu0 0
    %139 = vmatpush1.bf16.msra.mxu0 0
    %140 = vmatprep.subr.bf16.mxu0 0
    %141 = vmatpush1.bf16.msra.mxu0 0
    %142 = vmatprep.subr.bf16.mxu0 %v120
    %143 = vmatpush1.bf16.msra.mxu0 %v117
    %144 = vmatprep.subr.bf16.mxu0 0
    %145 = vmatpush2.bf16.msra.mxu0 0
    %146 = vmatprep.subr.bf16.mxu0 0
    %147 = vmatpush2.bf16.msra.mxu0 0
    %148 = vmatprep.subr.bf16.mxu0 0
    %149 = vmatpush2.bf16.msra.mxu0 0
    %150 = vmatprep.subr.bf16.mxu0 0
    %151 = vmatpush2.bf16.msra.mxu0 0
    %152 = vmatprep.subr.bf16.mxu0 0
    %153 = vmatpush2.bf16.msra.mxu0 0
    %154 = vmatprep.subr.bf16.mxu0 0
    %155 = vmatpush2.bf16.msra.mxu0 0
    %156 = vmatprep.subr.bf16.mxu0 0
    %157 = vmatpush2.bf16.msra.mxu0 0
    %158 = vmatprep.subr.bf16.mxu0 0
    %159 = vmatpush2.bf16.msra.mxu0 0
    %160 = vmatprep.mubr.bf16.mxu0 0
    %161 = vmatmul.mubr.bf16.gmra.mxu0 %v104
    %v162 = vpop.f32.mrf.mxu0
    %v163 = vadd.f32 %v55, %v162
    %v164 = vpop.f32.mrf.mxu0
    %v165 = vadd.f32 %v59, %v164
    %v166 = vpop.f32.mrf.mxu0
    %v167 = vadd.f32 %v55, %v166
    %v168 = vpop.f32.mrf.mxu0
    %v169 = vadd.f32 %v59, %v168
    %170 = vmatprep.mubr.bf16.mxu0 0
    %171 = vmatmul.mubr.bf16.gmra.mxu0 %v107
    %v172 = vpop.f32.mrf.mxu0
    %v173 = vadd.f32 %v55, %v172
    %v174 = vpop.f32.mrf.mxu0
    %v175 = vadd.f32 %v59, %v174
    %v176 = vpop.f32.mrf.mxu0
    %v177 = vadd.f32 %v55, %v176
    %v178 = vpop.f32.mrf.mxu0
    %v179 = vadd.f32 %v59, %v178
    %180 = vmatprep.mubr.bf16.mxu0 0
    %181 = vmatmul.mubr.bf16.gmra.mxu0 %v110
    %v182 = vpop.f32.mrf.mxu0
    %v183 = vadd.f32 %v55, %v182
    %v184 = vpop.f32.mrf.mxu0
    %v185 = vadd.f32 %v59, %v184
    %v186 = vpop.f32.mrf.mxu0
    %v187 = vadd.f32 %v55, %v186
    %v188 = vpop.f32.mrf.mxu0
    %v189 = vadd.f32 %v59, %v188
    %190 = vmatprep.mubr.bf16.mxu0 0
    %191 = vmatmul.mubr.bf16.gmra.mxu0 %v113
    %v192 = vpop.f32.mrf.mxu0
    %v193 = vadd.f32 %v55, %v192
    %v194 = vpop.f32.mrf.mxu0
    %v195 = vadd.f32 %v59, %v194
    %v196 = vpop.f32.mrf.mxu0
    %v197 = vadd.f32 %v55, %v196
    %v198 = vpop.f32.mrf.mxu0
    %v199 = vadd.f32 %v59, %v198
    %200 = vdwg.mxu0
    %201 = vmatprep.subr.bf16.mxu0 0
    %202 = vmatpush1.bf16.msra.mxu0 0
    %203 = vmatprep.subr.bf16.mxu0 0
    %204 = vmatpush1.bf16.msra.mxu0 0
    %205 = vmatprep.subr.bf16.mxu0 0
    %206 = vmatpush1.bf16.msra.mxu0 0
    %207 = vmatprep.subr.bf16.mxu0 0
    %208 = vmatpush1.bf16.msra.mxu0 0
    %209 = vmatprep.subr.bf16.mxu0 0
    %210 = vmatpush1.bf16.msra.mxu0 0
    %211 = vmatprep.subr.bf16.mxu0 0
    %212 = vmatpush1.bf16.msra.mxu0 0
    %213 = vmatprep.subr.bf16.mxu0 0
    %214 = vmatpush1.bf16.msra.mxu0 0
    %215 = vmatprep.subr.bf16.mxu0 %v126
    %216 = vmatpush1.bf16.msra.mxu0 %v123
    %217 = vmatprep.subr.bf16.mxu0 0
    %218 = vmatpush2.bf16.msra.mxu0 0
    %219 = vmatprep.subr.bf16.mxu0 0
    %220 = vmatpush2.bf16.msra.mxu0 0
    %221 = vmatprep.subr.bf16.mxu0 0
    %222 = vmatpush2.bf16.msra.mxu0 0
    %223 = vmatprep.subr.bf16.mxu0 0
    %224 = vmatpush2.bf16.msra.mxu0 0
    %225 = vmatprep.subr.bf16.mxu0 0
    %226 = vmatpush2.bf16.msra.mxu0 0
    %227 = vmatprep.subr.bf16.mxu0 0
    %228 = vmatpush2.bf16.msra.mxu0 0
    %229 = vmatprep.subr.bf16.mxu0 0
    %230 = vmatpush2.bf16.msra.mxu0 0
    %231 = vmatprep.subr.bf16.mxu0 0
    %232 = vmatpush2.bf16.msra.mxu0 0
    %233 = vmatprep.mubr.bf16.mxu0 0
    %234 = vmatmul.mubr.bf16.gmra.mxu0 %v104
    %v235 = vpop.f32.mrf.mxu0
    %v236 = vadd.f32 %v63, %v235
    %v237 = vpop.f32.mrf.mxu0
    %v238 = vadd.f32 %v67, %v237
    %v239 = vpop.f32.mrf.mxu0
    %v240 = vadd.f32 %v63, %v239
    %v241 = vpop.f32.mrf.mxu0
    %v242 = vadd.f32 %v67, %v241
    %243 = vmatprep.mubr.bf16.mxu0 0
    %244 = vmatmul.mubr.bf16.gmra.mxu0 %v107
    %v245 = vpop.f32.mrf.mxu0
    %v246 = vadd.f32 %v63, %v245
    %v247 = vpop.f32.mrf.mxu0
    %v248 = vadd.f32 %v67, %v247
    %v249 = vpop.f32.mrf.mxu0
    %v250 = vadd.f32 %v63, %v249
    %v251 = vpop.f32.mrf.mxu0
    %v252 = vadd.f32 %v67, %v251
    %253 = vmatprep.mubr.bf16.mxu0 0
    %254 = vmatmul.mubr.bf16.gmra.mxu0 %v110
    %v255 = vpop.f32.mrf.mxu0
    %v256 = vadd.f32 %v63, %v255
    %v257 = vpop.f32.mrf.mxu0
    %v258 = vadd.f32 %v67, %v257
    %v259 = vpop.f32.mrf.mxu0
    %v260 = vadd.f32 %v63, %v259
    %v261 = vpop.f32.mrf.mxu0
    %v262 = vadd.f32 %v67, %v261
    %263 = vmatprep.mubr.bf16.mxu0 0
    %264 = vmatmul.mubr.bf16.gmra.mxu0 %v113
    %v265 = vpop.f32.mrf.mxu0
    %v266 = vadd.f32 %v63, %v265
    %v267 = vpop.f32.mrf.mxu0
    %v268 = vadd.f32 %v67, %v267
    %v269 = vpop.f32.mrf.mxu0
    %v270 = vadd.f32 %v63, %v269
    %v271 = vpop.f32.mrf.mxu0
    %v272 = vadd.f32 %v67, %v271
    %273 = vdwg.mxu0
    %274 = vst [vmem:[#allocation2] sm:$0xff] %v163
    %275 = vst [vmem:[#allocation2 + $0x8] sm:$0xff] %v165
    %276 = vst [vmem:[#allocation2 + $0x10] sm:$0xff] %v236
    %277 = vst [vmem:[#allocation2 + $0x18] sm:$0xff] %v238
    %278 = vst [vmem:[#allocation2 + $0x20] sm:$0xff] %v167
    %279 = vst [vmem:[#allocation2 + $0x28] sm:$0xff] %v169
    %280 = vst [vmem:[#allocation2 + $0x30] sm:$0xff] %v240
    %281 = vst [vmem:[#allocation2 + $0x38] sm:$0xff] %v242
    %282 = vst [vmem:[#allocation2 + $0x40] sm:$0xff] %v173
    %283 = vst [vmem:[#allocation2 + $0x48] sm:$0xff] %v175
    %284 = vst [vmem:[#allocation2 + $0x50] sm:$0xff] %v246
    %285 = vst [vmem:[#allocation2 + $0x58] sm:$0xff] %v248
    %286 = vst [vmem:[#allocation2 + $0x60] sm:$0xff] %v177
    %287 = vst [vmem:[#allocation2 + $0x68] sm:$0xff] %v179
    %288 = vst [vmem:[#allocation2 + $0x70] sm:$0xff] %v250
    %289 = vst [vmem:[#allocation2 + $0x78] sm:$0xff] %v252
    %290 = vst [vmem:[#allocation2 + $0x80] sm:$0xff] %v183
    %291 = vst [vmem:[#allocation2 + $0x88] sm:$0xff] %v185
    %292 = vst [vmem:[#allocation2 + $0x90] sm:$0xff] %v256
    %293 = vst [vmem:[#allocation2 + $0x98] sm:$0xff] %v258
    %294 = vst [vmem:[#allocation2 + $0xa0] sm:$0xff] %v187
    %295 = vst [vmem:[#allocation2 + $0xa8] sm:$0xff] %v189
    %296 = vst [vmem:[#allocation2 + $0xb0] sm:$0xff] %v260
    %297 = vst [vmem:[#allocation2 + $0xb8] sm:$0xff] %v262
    %298 = vst [vmem:[#allocation2 + $0xc0] sm:$0xff] %v193
    %299 = vst [vmem:[#allocation2 + $0xc8] sm:$0xff] %v195
    %300 = vst [vmem:[#allocation2 + $0xd0] sm:$0xff] %v266
    %301 = vst [vmem:[#allocation2 + $0xd8] sm:$0xff] %v268
    %302 = vst [vmem:[#allocation2 + $0xe0] sm:$0xff] %v197
    %303 = vst [vmem:[#allocation2 + $0xe8] sm:$0xff] %v199
    %304 = vst [vmem:[#allocation2 + $0xf0] sm:$0xff] %v270
    %305 = vst [vmem:[#allocation2 + $0xf8] sm:$0xff] %v272
    %v306 = vlaneseq
    %v307 = vand.u32 %v306, 127
    %vm308 = vcmp.lt.s32.totalorder %v307, 64
    %v309 = vld [vmem:[#allocation2] sm:$0xff]
    %v310 = vld [vmem:[#allocation2 + $0x10] sm:$0xff]
    %v311 = vld [vmem:[#allocation2 + $0x18] sm:$0xff]
    %v312 = vtanh.pop %v309
    %v313 = vtanh.pop %v310
    %v314 = vtanh.pop %v311
    %v315 = vmul.f32 %v312, 0.5
    %v316 = vmul.f32 %v314, 0.5
    %v317 = vadd.f32 %v315, 0.5
    %v318 = vadd.f32 %v316, 0.5
    %v319 = vmul.f32 %v317, %v313
    %v320 = vsel %vm308, %v319, 0.0
    %v321 = vtanh.pop %v320
    %v322 = vmul.f32 %v318, %v321
    %v323 = vsel %vm308, %v322, 0.0
    %v324 = vld [vmem:[#allocation2 + $0x20] sm:$0xff]
    %v325 = vld [vmem:[#allocation2 + $0x28] sm:$0xff]
    %v326 = vld [vmem:[#allocation2 + $0x30] sm:$0xff]
    %v327 = vld [vmem:[#allocation2 + $0x38] sm:$0xff]
    %v328 = vpack.c.bf16 %v323, %v323
    %v329 = vld [vmem:[#allocation4] sm:$0xff]
    %v330 = vld [vmem:[#allocation4 + $0x8] sm:$0xff]
    %v331 = vld [vmem:[#allocation4 + $0x10] sm:$0xff]
    %v332 = vld [vmem:[#allocation4 + $0x18] sm:$0xff]
    %v333 = vld [vmem:[#allocation4 + $0x20] sm:$0xff]
    %v334 = vld [vmem:[#allocation4 + $0x28] sm:$0xff]
    %v335 = vld [vmem:[#allocation4 + $0x30] sm:$0xff]
    %v336 = vld [vmem:[#allocation4 + $0x38] sm:$0xff]
    %v337 = vld [vmem:[#allocation4 + $0x40] sm:$0xff]
    %v338 = vld [vmem:[#allocation4 + $0x48] sm:$0xff]
    %v339 = vld [vmem:[#allocation4 + $0x50] sm:$0xff]
    %v340 = vld [vmem:[#allocation4 + $0x58] sm:$0xff]
    %v341 = vld [vmem:[#allocation4 + $0x60] sm:$0xff]
    %v342 = vld [vmem:[#allocation4 + $0x68] sm:$0xff]
    %v343 = vld [vmem:[#allocation4 + $0x70] sm:$0xff]
    %v344 = vld [vmem:[#allocation4 + $0x78] sm:$0xff]
    %v345 = vld [vmem:[#allocation4 + $0x80] sm:$0xff]
    %v346 = vld [vmem:[#allocation4 + $0x88] sm:$0xff]
    %v347 = vld [vmem:[#allocation4 + $0x90] sm:$0xff]
    %v348 = vld [vmem:[#allocation4 + $0x98] sm:$0xff]
    %v349 = vld [vmem:[#allocation4 + $0xa0] sm:$0xff]
    %v350 = vld [vmem:[#allocation4 + $0xa8] sm:$0xff]
    %v351 = vld [vmem:[#allocation4 + $0xb0] sm:$0xff]
    %v352 = vld [vmem:[#allocation4 + $0xb8] sm:$0xff]
    %v353 = vld [vmem:[#allocation4 + $0xc0] sm:$0xff]
    %v354 = vld [vmem:[#allocation4 + $0xc8] sm:$0xff]
    %v355 = vld [vmem:[#allocation4 + $0xd0] sm:$0xff]
    %v356 = vld [vmem:[#allocation4 + $0xd8] sm:$0xff]
    %v357 = vld [vmem:[#allocation4 + $0xe0] sm:$0xff]
    %v358 = vld [vmem:[#allocation4 + $0xe8] sm:$0xff]
    %v359 = vld [vmem:[#allocation4 + $0xf0] sm:$0xff]
    %v360 = vld [vmem:[#allocation4 + $0xf8] sm:$0xff]
    %v393 = vunpack.c.l.b16 %v329
    %v394 = vunpack.c.h.b16 %v329
    %v395 = vunpack.c.l.b16 %v330
    %v396 = vunpack.c.h.b16 %v330
    %v397 = vunpack.c.l.b16 %v331
    %v398 = vunpack.c.h.b16 %v331
    %v399 = vunpack.c.l.b16 %v332
    %v400 = vunpack.c.h.b16 %v332
    %v401 = vunpack.c.l.b16 %v333
    %v402 = vunpack.c.h.b16 %v333
    %v403 = vunpack.c.l.b16 %v334
    %v404 = vunpack.c.h.b16 %v334
    %v405 = vunpack.c.l.b16 %v335
    %v406 = vunpack.c.h.b16 %v335
    %v407 = vunpack.c.l.b16 %v336
    %v408 = vunpack.c.h.b16 %v336
    %v409 = vunpack.c.l.b16 %v337
    %v410 = vunpack.c.h.b16 %v337
    %v411 = vunpack.c.l.b16 %v338
    %v412 = vunpack.c.h.b16 %v338
    %v413 = vunpack.c.l.b16 %v339
    %v414 = vunpack.c.h.b16 %v339
    %v415 = vunpack.c.l.b16 %v340
    %v416 = vunpack.c.h.b16 %v340
    %v417 = vunpack.c.l.b16 %v341
    %v418 = vunpack.c.h.b16 %v341
    %v419 = vunpack.c.l.b16 %v342
    %v420 = vunpack.c.h.b16 %v342
    %v421 = vunpack.c.l.b16 %v343
    %v422 = vunpack.c.h.b16 %v343
    %v423 = vunpack.c.l.b16 %v344
    %v424 = vunpack.c.h.b16 %v344
    %v425 = vunpack.c.l.b16 %v345
    %v426 = vunpack.c.h.b16 %v345
    %v427 = vunpack.c.l.b16 %v346
    %v428 = vunpack.c.h.b16 %v346
    %v429 = vunpack.c.l.b16 %v347
    %v430 = vunpack.c.h.b16 %v347
    %v431 = vunpack.c.l.b16 %v348
    %v432 = vunpack.c.h.b16 %v348
    %v433 = vunpack.c.l.b16 %v349
    %v434 = vunpack.c.h.b16 %v349
    %v435 = vunpack.c.l.b16 %v350
    %v436 = vunpack.c.h.b16 %v350
    %v437 = vunpack.c.l.b16 %v351
    %v438 = vunpack.c.h.b16 %v351
    %v439 = vunpack.c.l.b16 %v352
    %v440 = vunpack.c.h.b16 %v352
    %v441 = vunpack.c.l.b16 %v353
    %v442 = vunpack.c.h.b16 %v353
    %v443 = vunpack.c.l.b16 %v354
    %v444 = vunpack.c.h.b16 %v354
    %v445 = vunpack.c.l.b16 %v355
    %v446 = vunpack.c.h.b16 %v355
    %v447 = vunpack.c.l.b16 %v356
    %v448 = vunpack.c.h.b16 %v356
    %v449 = vunpack.c.l.b16 %v357
    %v450 = vunpack.c.h.b16 %v357
    %v451 = vunpack.c.l.b16 %v358
    %v452 = vunpack.c.h.b16 %v358
    %v453 = vunpack.c.l.b16 %v359
    %v454 = vunpack.c.h.b16 %v359
    %v455 = vunpack.c.l.b16 %v360
    %v456 = vunpack.c.h.b16 %v360
    %v457 = vpack.c.b16 %v397, %v393
    %v458 = vpack.c.b16 %v398, %v394
    %v459 = vpack.c.b16 %v399, %v395
    %v460 = vpack.c.b16 %v400, %v396
    %v461 = vpack.c.b16 %v405, %v401
    %v462 = vpack.c.b16 %v406, %v402
    %v463 = vpack.c.b16 %v407, %v403
    %v464 = vpack.c.b16 %v408, %v404
    %v465 = vpack.c.b16 %v413, %v409
    %v466 = vpack.c.b16 %v414, %v410
    %v467 = vpack.c.b16 %v415, %v411
    %v468 = vpack.c.b16 %v416, %v412
    %v469 = vpack.c.b16 %v421, %v417
    %v470 = vpack.c.b16 %v422, %v418
    %v471 = vpack.c.b16 %v423, %v419
    %v472 = vpack.c.b16 %v424, %v420
    %v473 = vpack.c.b16 %v429, %v425
    %v474 = vpack.c.b16 %v430, %v426
    %v475 = vpack.c.b16 %v431, %v427
    %v476 = vpack.c.b16 %v432, %v428
    %v477 = vpack.c.b16 %v437, %v433
    %v478 = vpack.c.b16 %v438, %v434
    %v479 = vpack.c.b16 %v439, %v435
    %v480 = vpack.c.b16 %v440, %v436
    %v481 = vpack.c.b16 %v445, %v441
    %v482 = vpack.c.b16 %v446, %v442
    %v483 = vpack.c.b16 %v447, %v443
    %v484 = vpack.c.b16 %v448, %v444
    %v485 = vpack.c.b16 %v453, %v449
    %v486 = vpack.c.b16 %v454, %v450
    %v487 = vpack.c.b16 %v455, %v451
    %v488 = vpack.c.b16 %v456, %v452
    %521 = vmatprep.subr.bf16.mxu0 %v486
    %522 = vmatpush1.bf16.msra.mxu0 %v485
    %523 = vmatprep.subr.bf16.mxu0 %v482
    %524 = vmatpush1.bf16.msra.mxu0 %v481
    %525 = vmatprep.subr.bf16.mxu0 %v478
    %526 = vmatpush1.bf16.msra.mxu0 %v477
    %527 = vmatprep.subr.bf16.mxu0 %v474
    %528 = vmatpush1.bf16.msra.mxu0 %v473
    %529 = vmatprep.subr.bf16.mxu0 %v470
    %530 = vmatpush1.bf16.msra.mxu0 %v469
    %531 = vmatprep.subr.bf16.mxu0 %v466
    %532 = vmatpush1.bf16.msra.mxu0 %v465
    %533 = vmatprep.subr.bf16.mxu0 %v462
    %534 = vmatpush1.bf16.msra.mxu0 %v461
    %535 = vmatprep.subr.bf16.mxu0 %v458
    %536 = vmatpush1.bf16.msra.mxu0 %v457
    %537 = vmatprep.subr.bf16.mxu0 0
    %538 = vmatpush2.bf16.msra.mxu0 0
    %539 = vmatprep.subr.bf16.mxu0 0
    %540 = vmatpush2.bf16.msra.mxu0 0
    %541 = vmatprep.subr.bf16.mxu0 0
    %542 = vmatpush2.bf16.msra.mxu0 0
    %543 = vmatprep.subr.bf16.mxu0 0
    %544 = vmatpush2.bf16.msra.mxu0 0
    %545 = vmatprep.subr.bf16.mxu0 0
    %546 = vmatpush2.bf16.msra.mxu0 0
    %547 = vmatprep.subr.bf16.mxu0 0
    %548 = vmatpush2.bf16.msra.mxu0 0
    %549 = vmatprep.subr.bf16.mxu0 0
    %550 = vmatpush2.bf16.msra.mxu0 0
    %551 = vmatprep.subr.bf16.mxu0 0
    %552 = vmatpush2.bf16.msra.mxu0 0
    %553 = vmatprep.mubr.bf16.mxu0 0
    %554 = vmatmul.mubr.bf16.gmra.mxu0 %v328
    %v555 = vpop.f32.mrf.mxu0
    %v556 = vadd.f32 0.0, %v555
    %v557 = vpop.f32.mrf.mxu0
    %v558 = vadd.f32 0.0, %v557
    %v559 = vpop.f32.mrf.mxu0
    %v560 = vpop.f32.mrf.mxu0
    %561 = vdwg.mxu0
    %562 = vmatprep.subr.bf16.mxu0 %v488
    %563 = vmatpush1.bf16.msra.mxu0 %v487
    %564 = vmatprep.subr.bf16.mxu0 %v484
    %565 = vmatpush1.bf16.msra.mxu0 %v483
    %566 = vmatprep.subr.bf16.mxu0 %v480
    %567 = vmatpush1.bf16.msra.mxu0 %v479
    %568 = vmatprep.subr.bf16.mxu0 %v476
    %569 = vmatpush1.bf16.msra.mxu0 %v475
    %570 = vmatprep.subr.bf16.mxu0 %v472
    %571 = vmatpush1.bf16.msra.mxu0 %v471
    %572 = vmatprep.subr.bf16.mxu0 %v468
    %573 = vmatpush1.bf16.msra.mxu0 %v467
    %574 = vmatprep.subr.bf16.mxu0 %v464
    %575 = vmatpush1.bf16.msra.mxu0 %v463
    %576 = vmatprep.subr.bf16.mxu0 %v460
    %577 = vmatpush1.bf16.msra.mxu0 %v459
    %578 = vmatprep.subr.bf16.mxu0 0
    %579 = vmatpush2.bf16.msra.mxu0 0
    %580 = vmatprep.subr.bf16.mxu0 0
    %581 = vmatpush2.bf16.msra.mxu0 0
    %582 = vmatprep.subr.bf16.mxu0 0
    %583 = vmatpush2.bf16.msra.mxu0 0
    %584 = vmatprep.subr.bf16.mxu0 0
    %585 = vmatpush2.bf16.msra.mxu0 0
    %586 = vmatprep.subr.bf16.mxu0 0
    %587 = vmatpush2.bf16.msra.mxu0 0
    %588 = vmatprep.subr.bf16.mxu0 0
    %589 = vmatpush2.bf16.msra.mxu0 0
    %590 = vmatprep.subr.bf16.mxu0 0
    %591 = vmatpush2.bf16.msra.mxu0 0
    %592 = vmatprep.subr.bf16.mxu0 0
    %593 = vmatpush2.bf16.msra.mxu0 0
    %594 = vmatprep.mubr.bf16.mxu0 0
    %595 = vmatmul.mubr.bf16.gmra.mxu0 %v328
    %v596 = vpop.f32.mrf.mxu0
    %v597 = vadd.f32 0.0, %v596
    %v598 = vpop.f32.mrf.mxu0
    %v599 = vadd.f32 0.0, %v598
    %v600 = vpop.f32.mrf.mxu0
    %v601 = vpop.f32.mrf.mxu0
    %602 = vdwg.mxu0
    %v603 = vadd.f32 %v324, %v556
    %v604 = vadd.f32 %v325, %v558
    %v605 = vadd.f32 %v326, %v597
    %v606 = vadd.f32 %v327, %v599
    %v607 = vtanh.pop %v603
    %v608 = vtanh.pop %v604
    %v609 = vtanh.pop %v605
    %v610 = vtanh.pop %v606
    %v611 = vmul.f32 %v607, 0.5
    %v612 = vmul.f32 %v608, 0.5
    %v613 = vmul.f32 %v610, 0.5
    %v614 = vadd.f32 %v611, 0.5
    %v615 = vadd.f32 %v612, 0.5
    %v616 = vadd.f32 %v613, 0.5
    %v617 = vmul.f32 %v615, %v320
    %v618 = vmul.f32 %v614, %v609
    %v619 = vadd.f32 %v617, %v618
    %v620 = vtanh.pop %v619
    %v621 = vmul.f32 %v616, %v620
    %v622 = vld [vmem:[#allocation2 + $0x40] sm:$0xff]
    %v623 = vld [vmem:[#allocation2 + $0x48] sm:$0xff]
    %v624 = vld [vmem:[#allocation2 + $0x50] sm:$0xff]
    %v625 = vld [vmem:[#allocation2 + $0x58] sm:$0xff]
    %v626 = vpack.c.bf16 %v621, %v621
    %627 = vmatprep.subr.bf16.mxu0 %v486
    %628 = vmatpush1.bf16.msra.mxu0 %v485
    %629 = vmatprep.subr.bf16.mxu0 %v482
    %630 = vmatpush1.bf16.msra.mxu0 %v481
    %631 = vmatprep.subr.bf16.mxu0 %v478
    %632 = vmatpush1.bf16.msra.mxu0 %v477
    %633 = vmatprep.subr.bf16.mxu0 %v474
    %634 = vmatpush1.bf16.msra.mxu0 %v473
    %635 = vmatprep.subr.bf16.mxu0 %v470
    %636 = vmatpush1.bf16.msra.mxu0 %v469
    %637 = vmatprep.subr.bf16.mxu0 %v466
    %638 = vmatpush1.bf16.msra.mxu0 %v465
    %639 = vmatprep.subr.bf16.mxu0 %v462
    %640 = vmatpush1.bf16.msra.mxu0 %v461
    %641 = vmatprep.subr.bf16.mxu0 %v458
    %642 = vmatpush1.bf16.msra.mxu0 %v457
    %643 = vmatprep.subr.bf16.mxu0 0
    %644 = vmatpush2.bf16.msra.mxu0 0
    %645 = vmatprep.subr.bf16.mxu0 0
    %646 = vmatpush2.bf16.msra.mxu0 0
    %647 = vmatprep.subr.bf16.mxu0 0
    %648 = vmatpush2.bf16.msra.mxu0 0
    %649 = vmatprep.subr.bf16.mxu0 0
    %650 = vmatpush2.bf16.msra.mxu0 0
    %651 = vmatprep.subr.bf16.mxu0 0
    %652 = vmatpush2.bf16.msra.mxu0 0
    %653 = vmatprep.subr.bf16.mxu0 0
    %654 = vmatpush2.bf16.msra.mxu0 0
    %655 = vmatprep.subr.bf16.mxu0 0
    %656 = vmatpush2.bf16.msra.mxu0 0
    %657 = vmatprep.subr.bf16.mxu0 0
    %658 = vmatpush2.bf16.msra.mxu0 0
    %659 = vmatprep.mubr.bf16.mxu0 0
    %660 = vmatmul.mubr.bf16.gmra.mxu0 %v626
    %v661 = vpop.f32.mrf.mxu0
    %v662 = vadd.f32 0.0, %v661
    %v663 = vpop.f32.mrf.mxu0
    %v664 = vadd.f32 0.0, %v663
    %v665 = vpop.f32.mrf.mxu0
    %v666 = vpop.f32.mrf.mxu0
    %667 = vdwg.mxu0
    %668 = vmatprep.subr.bf16.mxu0 %v488
    %669 = vmatpush1.bf16.msra.mxu0 %v487
    %670 = vmatprep.subr.bf16.mxu0 %v484
    %671 = vmatpush1.bf16.msra.mxu0 %v483
    %672 = vmatprep.subr.bf16.mxu0 %v480
    %673 = vmatpush1.bf16.msra.mxu0 %v479
    %674 = vmatprep.subr.bf16.mxu0 %v476
    %675 = vmatpush1.bf16.msra.mxu0 %v475
    %676 = vmatprep.subr.bf16.mxu0 %v472
    %677 = vmatpush1.bf16.msra.mxu0 %v471
    %678 = vmatprep.subr.bf16.mxu0 %v468
    %679 = vmatpush1.bf16.msra.mxu0 %v467
    %680 = vmatprep.subr.bf16.mxu0 %v464
    %681 = vmatpush1.bf16.msra.mxu0 %v463
    %682 = vmatprep.subr.bf16.mxu0 %v460
    %683 = vmatpush1.bf16.msra.mxu0 %v459
    %684 = vmatprep.subr.bf16.mxu0 0
    %685 = vmatpush2.bf16.msra.mxu0 0
    %686 = vmatprep.subr.bf16.mxu0 0
    %687 = vmatpush2.bf16.msra.mxu0 0
    %688 = vmatprep.subr.bf16.mxu0 0
    %689 = vmatpush2.bf16.msra.mxu0 0
    %690 = vmatprep.subr.bf16.mxu0 0
    %691 = vmatpush2.bf16.msra.mxu0 0
    %692 = vmatprep.subr.bf16.mxu0 0
    %693 = vmatpush2.bf16.msra.mxu0 0
    %694 = vmatprep.subr.bf16.mxu0 0
    %695 = vmatpush2.bf16.msra.mxu0 0
    %696 = vmatprep.subr.bf16.mxu0 0
    %697 = vmatpush2.bf16.msra.mxu0 0
    %698 = vmatprep.subr.bf16.mxu0 0
    %699 = vmatpush2.bf16.msra.mxu0 0
    %700 = vmatprep.mubr.bf16.mxu0 0
    %701 = vmatmul.mubr.bf16.gmra.mxu0 %v626
    %v702 = vpop.f32.mrf.mxu0
    %v703 = vadd.f32 0.0, %v702
    %v704 = vpop.f32.mrf.mxu0
    %v705 = vadd.f32 0.0, %v704
    %v706 = vpop.f32.mrf.mxu0
    %v707 = vpop.f32.mrf.mxu0
    %708 = vdwg.mxu0
    %v709 = vadd.f32 %v622, %v662
    %v710 = vadd.f32 %v623, %v664
    %v711 = vadd.f32 %v624, %v703
    %v712 = vadd.f32 %v625, %v705
    %v713 = vtanh.pop %v709
    %v714 = vtanh.pop %v710
    %v715 = vtanh.pop %v711
    %v716 = vtanh.pop %v712
    %v717 = vmul.f32 %v713, 0.5
    %v718 = vmul.f32 %v714, 0.5
    %v719 = vmul.f32 %v716, 0.5
    %v720 = vadd.f32 %v717, 0.5
    %v721 = vadd.f32 %v718, 0.5
    %v722 = vadd.f32 %v719, 0.5
    %v723 = vmul.f32 %v721, %v619
    %v724 = vmul.f32 %v720, %v715
    %v725 = vadd.f32 %v723, %v724
    %v726 = vtanh.pop %v725
    %v727 = vmul.f32 %v722, %v726
    %v728 = vld [vmem:[#allocation2 + $0x60] sm:$0xff]
    %v729 = vld [vmem:[#allocation2 + $0x68] sm:$0xff]
    %v730 = vld [vmem:[#allocation2 + $0x70] sm:$0xff]
    %v731 = vld [vmem:[#allocation2 + $0x78] sm:$0xff]
    %v732 = vpack.c.bf16 %v727, %v727
    %733 = vmatprep.subr.bf16.mxu0 %v486
    %734 = vmatpush1.bf16.msra.mxu0 %v485
    %735 = vmatprep.subr.bf16.mxu0 %v482
    %736 = vmatpush1.bf16.msra.mxu0 %v481
    %737 = vmatprep.subr.bf16.mxu0 %v478
    %738 = vmatpush1.bf16.msra.mxu0 %v477
    %739 = vmatprep.subr.bf16.mxu0 %v474
    %740 = vmatpush1.bf16.msra.mxu0 %v473
    %741 = vmatprep.subr.bf16.mxu0 %v470
    %742 = vmatpush1.bf16.msra.mxu0 %v469
    %743 = vmatprep.subr.bf16.mxu0 %v466
    %744 = vmatpush1.bf16.msra.mxu0 %v465
    %745 = vmatprep.subr.bf16.mxu0 %v462
    %746 = vmatpush1.bf16.msra.mxu0 %v461
    %747 = vmatprep.subr.bf16.mxu0 %v458
    %748 = vmatpush1.bf16.msra.mxu0 %v457
    %749 = vmatprep.subr.bf16.mxu0 0
    %750 = vmatpush2.bf16.msra.mxu0 0
    %751 = vmatprep.subr.bf16.mxu0 0
    %752 = vmatpush2.bf16.msra.mxu0 0
    %753 = vmatprep.subr.bf16.mxu0 0
    %754 = vmatpush2.bf16.msra.mxu0 0
    %755 = vmatprep.subr.bf16.mxu0 0
    %756 = vmatpush2.bf16.msra.mxu0 0
    %757 = vmatprep.subr.bf16.mxu0 0
    %758 = vmatpush2.bf16.msra.mxu0 0
    %759 = vmatprep.subr.bf16.mxu0 0
    %760 = vmatpush2.bf16.msra.mxu0 0
    %761 = vmatprep.subr.bf16.mxu0 0
    %762 = vmatpush2.bf16.msra.mxu0 0
    %763 = vmatprep.subr.bf16.mxu0 0
    %764 = vmatpush2.bf16.msra.mxu0 0
    %765 = vmatprep.mubr.bf16.mxu0 0
    %766 = vmatmul.mubr.bf16.gmra.mxu0 %v732
    %v767 = vpop.f32.mrf.mxu0
    %v768 = vadd.f32 0.0, %v767
    %v769 = vpop.f32.mrf.mxu0
    %v770 = vadd.f32 0.0, %v769
    %v771 = vpop.f32.mrf.mxu0
    %v772 = vpop.f32.mrf.mxu0
    %773 = vdwg.mxu0
    %774 = vmatprep.subr.bf16.mxu0 %v488
    %775 = vmatpush1.bf16.msra.mxu0 %v487
    %776 = vmatprep.subr.bf16.mxu0 %v484
    %777 = vmatpush1.bf16.msra.mxu0 %v483
    %778 = vmatprep.subr.bf16.mxu0 %v480
    %779 = vmatpush1.bf16.msra.mxu0 %v479
    %780 = vmatprep.subr.bf16.mxu0 %v476
    %781 = vmatpush1.bf16.msra.mxu0 %v475
    %782 = vmatprep.subr.bf16.mxu0 %v472
    %783 = vmatpush1.bf16.msra.mxu0 %v471
    %784 = vmatprep.subr.bf16.mxu0 %v468
    %785 = vmatpush1.bf16.msra.mxu0 %v467
    %786 = vmatprep.subr.bf16.mxu0 %v464
    %787 = vmatpush1.bf16.msra.mxu0 %v463
    %788 = vmatprep.subr.bf16.mxu0 %v460
    %789 = vmatpush1.bf16.msra.mxu0 %v459
    %790 = vmatprep.subr.bf16.mxu0 0
    %791 = vmatpush2.bf16.msra.mxu0 0
    %792 = vmatprep.subr.bf16.mxu0 0
    %793 = vmatpush2.bf16.msra.mxu0 0
    %794 = vmatprep.subr.bf16.mxu0 0
    %795 = vmatpush2.bf16.msra.mxu0 0
    %796 = vmatprep.subr.bf16.mxu0 0
    %797 = vmatpush2.bf16.msra.mxu0 0
    %798 = vmatprep.subr.bf16.mxu0 0
    %799 = vmatpush2.bf16.msra.mxu0 0
    %800 = vmatprep.subr.bf16.mxu0 0
    %801 = vmatpush2.bf16.msra.mxu0 0
    %802 = vmatprep.subr.bf16.mxu0 0
    %803 = vmatpush2.bf16.msra.mxu0 0
    %804 = vmatprep.subr.bf16.mxu0 0
    %805 = vmatpush2.bf16.msra.mxu0 0
    %806 = vmatprep.mubr.bf16.mxu0 0
    %807 = vmatmul.mubr.bf16.gmra.mxu0 %v732
    %v808 = vpop.f32.mrf.mxu0
    %v809 = vadd.f32 0.0, %v808
    %v810 = vpop.f32.mrf.mxu0
    %v811 = vadd.f32 0.0, %v810
    %v812 = vpop.f32.mrf.mxu0
    %v813 = vpop.f32.mrf.mxu0
    %814 = vdwg.mxu0
    %v815 = vadd.f32 %v728, %v768
    %v816 = vadd.f32 %v729, %v770
    %v817 = vadd.f32 %v730, %v809
    %v818 = vadd.f32 %v731, %v811
    %v819 = vtanh.pop %v815
    %v820 = vtanh.pop %v816
    %v821 = vtanh.pop %v817
    %v822 = vtanh.pop %v818
    %v823 = vmul.f32 %v819, 0.5
    %v824 = vmul.f32 %v820, 0.5
    %v825 = vmul.f32 %v822, 0.5
    %v826 = vadd.f32 %v823, 0.5
    %v827 = vadd.f32 %v824, 0.5
    %v828 = vadd.f32 %v825, 0.5
    %v829 = vmul.f32 %v827, %v725
    %v830 = vmul.f32 %v826, %v821
    %v831 = vadd.f32 %v829, %v830
    %v832 = vtanh.pop %v831
    %v833 = vmul.f32 %v828, %v832
    %v834 = vld [vmem:[#allocation2 + $0x80] sm:$0xff]
    %v835 = vld [vmem:[#allocation2 + $0x88] sm:$0xff]
    %v836 = vld [vmem:[#allocation2 + $0x90] sm:$0xff]
    %v837 = vld [vmem:[#allocation2 + $0x98] sm:$0xff]
    %v838 = vpack.c.bf16 %v833, %v833
    %839 = vmatprep.subr.bf16.mxu0 %v486
    %840 = vmatpush1.bf16.msra.mxu0 %v485
    %841 = vmatprep.subr.bf16.mxu0 %v482
    %842 = vmatpush1.bf16.msra.mxu0 %v481
    %843 = vmatprep.subr.bf16.mxu0 %v478
    %844 = vmatpush1.bf16.msra.mxu0 %v477
    %845 = vmatprep.subr.bf16.mxu0 %v474
    %846 = vmatpush1.bf16.msra.mxu0 %v473
    %847 = vmatprep.subr.bf16.mxu0 %v470
    %848 = vmatpush1.bf16.msra.mxu0 %v469
    %849 = vmatprep.subr.bf16.mxu0 %v466
    %850 = vmatpush1.bf16.msra.mxu0 %v465
    %851 = vmatprep.subr.bf16.mxu0 %v462
    %852 = vmatpush1.bf16.msra.mxu0 %v461
    %853 = vmatprep.subr.bf16.mxu0 %v458
    %854 = vmatpush1.bf16.msra.mxu0 %v457
    %855 = vmatprep.subr.bf16.mxu0 0
    %856 = vmatpush2.bf16.msra.mxu0 0
    %857 = vmatprep.subr.bf16.mxu0 0
    %858 = vmatpush2.bf16.msra.mxu0 0
    %859 = vmatprep.subr.bf16.mxu0 0
    %860 = vmatpush2.bf16.msra.mxu0 0
    %861 = vmatprep.subr.bf16.mxu0 0
    %862 = vmatpush2.bf16.msra.mxu0 0
    %863 = vmatprep.subr.bf16.mxu0 0
    %864 = vmatpush2.bf16.msra.mxu0 0
    %865 = vmatprep.subr.bf16.mxu0 0
    %866 = vmatpush2.bf16.msra.mxu0 0
    %867 = vmatprep.subr.bf16.mxu0 0
    %868 = vmatpush2.bf16.msra.mxu0 0
    %869 = vmatprep.subr.bf16.mxu0 0
    %870 = vmatpush2.bf16.msra.mxu0 0
    %871 = vmatprep.mubr.bf16.mxu0 0
    %872 = vmatmul.mubr.bf16.gmra.mxu0 %v838
    %v873 = vpop.f32.mrf.mxu0
    %v874 = vadd.f32 0.0, %v873
    %v875 = vpop.f32.mrf.mxu0
    %v876 = vadd.f32 0.0, %v875
    %v877 = vpop.f32.mrf.mxu0
    %v878 = vpop.f32.mrf.mxu0
    %879 = vdwg.mxu0
    %880 = vmatprep.subr.bf16.mxu0 %v488
    %881 = vmatpush1.bf16.msra.mxu0 %v487
    %882 = vmatprep.subr.bf16.mxu0 %v484
    %883 = vmatpush1.bf16.msra.mxu0 %v483
    %884 = vmatprep.subr.bf16.mxu0 %v480
    %885 = vmatpush1.bf16.msra.mxu0 %v479
    %886 = vmatprep.subr.bf16.mxu0 %v476
    %887 = vmatpush1.bf16.msra.mxu0 %v475
    %888 = vmatprep.subr.bf16.mxu0 %v472
    %889 = vmatpush1.bf16.msra.mxu0 %v471
    %890 = vmatprep.subr.bf16.mxu0 %v468
    %891 = vmatpush1.bf16.msra.mxu0 %v467
    %892 = vmatprep.subr.bf16.mxu0 %v464
    %893 = vmatpush1.bf16.msra.mxu0 %v463
    %894 = vmatprep.subr.bf16.mxu0 %v460
    %895 = vmatpush1.bf16.msra.mxu0 %v459
    %896 = vmatprep.subr.bf16.mxu0 0
    %897 = vmatpush2.bf16.msra.mxu0 0
    %898 = vmatprep.subr.bf16.mxu0 0
    %899 = vmatpush2.bf16.msra.mxu0 0
    %900 = vmatprep.subr.bf16.mxu0 0
    %901 = vmatpush2.bf16.msra.mxu0 0
    %902 = vmatprep.subr.bf16.mxu0 0
    %903 = vmatpush2.bf16.msra.mxu0 0
    %904 = vmatprep.subr.bf16.mxu0 0
    %905 = vmatpush2.bf16.msra.mxu0 0
    %906 = vmatprep.subr.bf16.mxu0 0
    %907 = vmatpush2.bf16.msra.mxu0 0
    %908 = vmatprep.subr.bf16.mxu0 0
    %909 = vmatpush2.bf16.msra.mxu0 0
    %910 = vmatprep.subr.bf16.mxu0 0
    %911 = vmatpush2.bf16.msra.mxu0 0
    %912 = vmatprep.mubr.bf16.mxu0 0
    %913 = vmatmul.mubr.bf16.gmra.mxu0 %v838
    %v914 = vpop.f32.mrf.mxu0
    %v915 = vadd.f32 0.0, %v914
    %v916 = vpop.f32.mrf.mxu0
    %v917 = vadd.f32 0.0, %v916
    %v918 = vpop.f32.mrf.mxu0
    %v919 = vpop.f32.mrf.mxu0
    %920 = vdwg.mxu0
    %v921 = vadd.f32 %v834, %v874
    %v922 = vadd.f32 %v835, %v876
    %v923 = vadd.f32 %v836, %v915
    %v924 = vadd.f32 %v837, %v917
    %v925 = vtanh.pop %v921
    %v926 = vtanh.pop %v922
    %v927 = vtanh.pop %v923
    %v928 = vtanh.pop %v924
    %v929 = vmul.f32 %v925, 0.5
    %v930 = vmul.f32 %v926, 0.5
    %v931 = vmul.f32 %v928, 0.5
    %v932 = vadd.f32 %v929, 0.5
    %v933 = vadd.f32 %v930, 0.5
    %v934 = vadd.f32 %v931, 0.5
    %v935 = vmul.f32 %v933, %v831
    %v936 = vmul.f32 %v932, %v927
    %v937 = vadd.f32 %v935, %v936
    %v938 = vtanh.pop %v937
    %v939 = vmul.f32 %v934, %v938
    %v940 = vld [vmem:[#allocation2 + $0xa0] sm:$0xff]
    %v941 = vld [vmem:[#allocation2 + $0xa8] sm:$0xff]
    %v942 = vld [vmem:[#allocation2 + $0xb0] sm:$0xff]
    %v943 = vld [vmem:[#allocation2 + $0xb8] sm:$0xff]
    %v944 = vpack.c.bf16 %v939, %v939
    %945 = vmatprep.subr.bf16.mxu0 %v486
    %946 = vmatpush1.bf16.msra.mxu0 %v485
    %947 = vmatprep.subr.bf16.mxu0 %v482
    %948 = vmatpush1.bf16.msra.mxu0 %v481
    %949 = vmatprep.subr.bf16.mxu0 %v478
    %950 = vmatpush1.bf16.msra.mxu0 %v477
    %951 = vmatprep.subr.bf16.mxu0 %v474
    %952 = vmatpush1.bf16.msra.mxu0 %v473
    %953 = vmatprep.subr.bf16.mxu0 %v470
    %954 = vmatpush1.bf16.msra.mxu0 %v469
    %955 = vmatprep.subr.bf16.mxu0 %v466
    %956 = vmatpush1.bf16.msra.mxu0 %v465
    %957 = vmatprep.subr.bf16.mxu0 %v462
    %958 = vmatpush1.bf16.msra.mxu0 %v461
    %959 = vmatprep.subr.bf16.mxu0 %v458
    %960 = vmatpush1.bf16.msra.mxu0 %v457
    %961 = vmatprep.subr.bf16.mxu0 0
    %962 = vmatpush2.bf16.msra.mxu0 0
    %963 = vmatprep.subr.bf16.mxu0 0
    %964 = vmatpush2.bf16.msra.mxu0 0
    %965 = vmatprep.subr.bf16.mxu0 0
    %966 = vmatpush2.bf16.msra.mxu0 0
    %967 = vmatprep.subr.bf16.mxu0 0
    %968 = vmatpush2.bf16.msra.mxu0 0
    %969 = vmatprep.subr.bf16.mxu0 0
    %970 = vmatpush2.bf16.msra.mxu0 0
    %971 = vmatprep.subr.bf16.mxu0 0
    %972 = vmatpush2.bf16.msra.mxu0 0
    %973 = vmatprep.subr.bf16.mxu0 0
    %974 = vmatpush2.bf16.msra.mxu0 0
    %975 = vmatprep.subr.bf16.mxu0 0
    %976 = vmatpush2.bf16.msra.mxu0 0
    %977 = vmatprep.mubr.bf16.mxu0 0
    %978 = vmatmul.mubr.bf16.gmra.mxu0 %v944
    %v979 = vpop.f32.mrf.mxu0
    %v980 = vadd.f32 0.0, %v979
    %v981 = vpop.f32.mrf.mxu0
    %v982 = vadd.f32 0.0, %v981
    %v983 = vpop.f32.mrf.mxu0
    %v984 = vpop.f32.mrf.mxu0
    %985 = vdwg.mxu0
    %986 = vmatprep.subr.bf16.mxu0 %v488
    %987 = vmatpush1.bf16.msra.mxu0 %v487
    %988 = vmatprep.subr.bf16.mxu0 %v484
    %989 = vmatpush1.bf16.msra.mxu0 %v483
    %990 = vmatprep.subr.bf16.mxu0 %v480
    %991 = vmatpush1.bf16.msra.mxu0 %v479
    %992 = vmatprep.subr.bf16.mxu0 %v476
    %993 = vmatpush1.bf16.msra.mxu0 %v475
    %994 = vmatprep.subr.bf16.mxu0 %v472
    %995 = vmatpush1.bf16.msra.mxu0 %v471
    %996 = vmatprep.subr.bf16.mxu0 %v468
    %997 = vmatpush1.bf16.msra.mxu0 %v467
    %998 = vmatprep.subr.bf16.mxu0 %v464
    %999 = vmatpush1.bf16.msra.mxu0 %v463
    %1000 = vmatprep.subr.bf16.mxu0 %v460
    %1001 = vmatpush1.bf16.msra.mxu0 %v459
    %1002 = vmatprep.subr.bf16.mxu0 0
    %1003 = vmatpush2.bf16.msra.mxu0 0
    %1004 = vmatprep.subr.bf16.mxu0 0
    %1005 = vmatpush2.bf16.msra.mxu0 0
    %1006 = vmatprep.subr.bf16.mxu0 0
    %1007 = vmatpush2.bf16.msra.mxu0 0
    %1008 = vmatprep.subr.bf16.mxu0 0
    %1009 = vmatpush2.bf16.msra.mxu0 0
    %1010 = vmatprep.subr.bf16.mxu0 0
    %1011 = vmatpush2.bf16.msra.mxu0 0
    %1012 = vmatprep.subr.bf16.mxu0 0
    %1013 = vmatpush2.bf16.msra.mxu0 0
    %1014 = vmatprep.subr.bf16.mxu0 0
    %1015 = vmatpush2.bf16.msra.mxu0 0
    %1016 = vmatprep.subr.bf16.mxu0 0
    %1017 = vmatpush2.bf16.msra.mxu0 0
    %1018 = vmatprep.mubr.bf16.mxu0 0
    %1019 = vmatmul.mubr.bf16.gmra.mxu0 %v944
    %v1020 = vpop.f32.mrf.mxu0
    %v1021 = vadd.f32 0.0, %v1020
    %v1022 = vpop.f32.mrf.mxu0
    %v1023 = vadd.f32 0.0, %v1022
    %v1024 = vpop.f32.mrf.mxu0
    %v1025 = vpop.f32.mrf.mxu0
    %1026 = vdwg.mxu0
    %v1027 = vadd.f32 %v940, %v980
    %v1028 = vadd.f32 %v941, %v982
    %v1029 = vadd.f32 %v942, %v1021
    %v1030 = vadd.f32 %v943, %v1023
    %v1031 = vtanh.pop %v1027
    %v1032 = vtanh.pop %v1028
    %v1033 = vtanh.pop %v1029
    %v1034 = vtanh.pop %v1030
    %v1035 = vmul.f32 %v1031, 0.5
    %v1036 = vmul.f32 %v1032, 0.5
    %v1037 = vmul.f32 %v1034, 0.5
    %v1038 = vadd.f32 %v1035, 0.5
    %v1039 = vadd.f32 %v1036, 0.5
    %v1040 = vadd.f32 %v1037, 0.5
    %v1041 = vmul.f32 %v1039, %v937
    %v1042 = vmul.f32 %v1038, %v1033
    %v1043 = vadd.f32 %v1041, %v1042
    %v1044 = vtanh.pop %v1043
    %v1045 = vmul.f32 %v1040, %v1044
    %v1046 = vld [vmem:[#allocation2 + $0xc0] sm:$0xff]
    %v1047 = vld [vmem:[#allocation2 + $0xc8] sm:$0xff]
    %v1048 = vld [vmem:[#allocation2 + $0xd0] sm:$0xff]
    %v1049 = vld [vmem:[#allocation2 + $0xd8] sm:$0xff]
    %v1050 = vpack.c.bf16 %v1045, %v1045
    %1051 = vmatprep.subr.bf16.mxu0 %v486
    %1052 = vmatpush1.bf16.msra.mxu0 %v485
    %1053 = vmatprep.subr.bf16.mxu0 %v482
    %1054 = vmatpush1.bf16.msra.mxu0 %v481
    %1055 = vmatprep.subr.bf16.mxu0 %v478
    %1056 = vmatpush1.bf16.msra.mxu0 %v477
    %1057 = vmatprep.subr.bf16.mxu0 %v474
    %1058 = vmatpush1.bf16.msra.mxu0 %v473
    %1059 = vmatprep.subr.bf16.mxu0 %v470
    %1060 = vmatpush1.bf16.msra.mxu0 %v469
    %1061 = vmatprep.subr.bf16.mxu0 %v466
    %1062 = vmatpush1.bf16.msra.mxu0 %v465
    %1063 = vmatprep.subr.bf16.mxu0 %v462
    %1064 = vmatpush1.bf16.msra.mxu0 %v461
    %1065 = vmatprep.subr.bf16.mxu0 %v458
    %1066 = vmatpush1.bf16.msra.mxu0 %v457
    %1067 = vmatprep.subr.bf16.mxu0 0
    %1068 = vmatpush2.bf16.msra.mxu0 0
    %1069 = vmatprep.subr.bf16.mxu0 0
    %1070 = vmatpush2.bf16.msra.mxu0 0
    %1071 = vmatprep.subr.bf16.mxu0 0
    %1072 = vmatpush2.bf16.msra.mxu0 0
    %1073 = vmatprep.subr.bf16.mxu0 0
    %1074 = vmatpush2.bf16.msra.mxu0 0
    %1075 = vmatprep.subr.bf16.mxu0 0
    %1076 = vmatpush2.bf16.msra.mxu0 0
    %1077 = vmatprep.subr.bf16.mxu0 0
    %1078 = vmatpush2.bf16.msra.mxu0 0
    %1079 = vmatprep.subr.bf16.mxu0 0
    %1080 = vmatpush2.bf16.msra.mxu0 0
    %1081 = vmatprep.subr.bf16.mxu0 0
    %1082 = vmatpush2.bf16.msra.mxu0 0
    %1083 = vmatprep.mubr.bf16.mxu0 0
    %1084 = vmatmul.mubr.bf16.gmra.mxu0 %v1050
    %v1085 = vpop.f32.mrf.mxu0
    %v1086 = vadd.f32 0.0, %v1085
    %v1087 = vpop.f32.mrf.mxu0
    %v1088 = vadd.f32 0.0, %v1087
    %v1089 = vpop.f32.mrf.mxu0
    %v1090 = vpop.f32.mrf.mxu0
    %1091 = vdwg.mxu0
    %1092 = vmatprep.subr.bf16.mxu0 %v488
    %1093 = vmatpush1.bf16.msra.mxu0 %v487
    %1094 = vmatprep.subr.bf16.mxu0 %v484
    %1095 = vmatpush1.bf16.msra.mxu0 %v483
    %1096 = vmatprep.subr.bf16.mxu0 %v480
    %1097 = vmatpush1.bf16.msra.mxu0 %v479
    %1098 = vmatprep.subr.bf16.mxu0 %v476
    %1099 = vmatpush1.bf16.msra.mxu0 %v475
    %1100 = vmatprep.subr.bf16.mxu0 %v472
    %1101 = vmatpush1.bf16.msra.mxu0 %v471
    %1102 = vmatprep.subr.bf16.mxu0 %v468
    %1103 = vmatpush1.bf16.msra.mxu0 %v467
    %1104 = vmatprep.subr.bf16.mxu0 %v464
    %1105 = vmatpush1.bf16.msra.mxu0 %v463
    %1106 = vmatprep.subr.bf16.mxu0 %v460
    %1107 = vmatpush1.bf16.msra.mxu0 %v459
    %1108 = vmatprep.subr.bf16.mxu0 0
    %1109 = vmatpush2.bf16.msra.mxu0 0
    %1110 = vmatprep.subr.bf16.mxu0 0
    %1111 = vmatpush2.bf16.msra.mxu0 0
    %1112 = vmatprep.subr.bf16.mxu0 0
    %1113 = vmatpush2.bf16.msra.mxu0 0
    %1114 = vmatprep.subr.bf16.mxu0 0
    %1115 = vmatpush2.bf16.msra.mxu0 0
    %1116 = vmatprep.subr.bf16.mxu0 0
    %1117 = vmatpush2.bf16.msra.mxu0 0
    %1118 = vmatprep.subr.bf16.mxu0 0
    %1119 = vmatpush2.bf16.msra.mxu0 0
    %1120 = vmatprep.subr.bf16.mxu0 0
    %1121 = vmatpush2.bf16.msra.mxu0 0
    %1122 = vmatprep.subr.bf16.mxu0 0
    %1123 = vmatpush2.bf16.msra.mxu0 0
    %1124 = vmatprep.mubr.bf16.mxu0 0
    %1125 = vmatmul.mubr.bf16.gmra.mxu0 %v1050
    %v1126 = vpop.f32.mrf.mxu0
    %v1127 = vadd.f32 0.0, %v1126
    %v1128 = vpop.f32.mrf.mxu0
    %v1129 = vadd.f32 0.0, %v1128
    %v1130 = vpop.f32.mrf.mxu0
    %v1131 = vpop.f32.mrf.mxu0
    %1132 = vdwg.mxu0
    %v1133 = vadd.f32 %v1046, %v1086
    %v1134 = vadd.f32 %v1047, %v1088
    %v1135 = vadd.f32 %v1048, %v1127
    %v1136 = vadd.f32 %v1049, %v1129
    %v1137 = vtanh.pop %v1133
    %v1138 = vtanh.pop %v1134
    %v1139 = vtanh.pop %v1135
    %v1140 = vtanh.pop %v1136
    %v1141 = vmul.f32 %v1137, 0.5
    %v1142 = vmul.f32 %v1138, 0.5
    %v1143 = vmul.f32 %v1140, 0.5
    %v1144 = vadd.f32 %v1141, 0.5
    %v1145 = vadd.f32 %v1142, 0.5
    %v1146 = vadd.f32 %v1143, 0.5
    %v1147 = vmul.f32 %v1145, %v1043
    %v1148 = vmul.f32 %v1144, %v1139
    %v1149 = vadd.f32 %v1147, %v1148
    %v1150 = vtanh.pop %v1149
    %v1151 = vmul.f32 %v1146, %v1150
    %v1152 = vld [vmem:[#allocation2 + $0xe0] sm:$0xff]
    %v1153 = vld [vmem:[#allocation2 + $0xe8] sm:$0xff]
    %v1154 = vld [vmem:[#allocation2 + $0xf0] sm:$0xff]
    %v1155 = vld [vmem:[#allocation2 + $0xf8] sm:$0xff]
    %v1156 = vpack.c.bf16 %v1151, %v1151
    %1157 = vmatprep.subr.bf16.mxu0 %v486
    %1158 = vmatpush1.bf16.msra.mxu0 %v485
    %1159 = vmatprep.subr.bf16.mxu0 %v482
    %1160 = vmatpush1.bf16.msra.mxu0 %v481
    %1161 = vmatprep.subr.bf16.mxu0 %v478
    %1162 = vmatpush1.bf16.msra.mxu0 %v477
    %1163 = vmatprep.subr.bf16.mxu0 %v474
    %1164 = vmatpush1.bf16.msra.mxu0 %v473
    %1165 = vmatprep.subr.bf16.mxu0 %v470
    %1166 = vmatpush1.bf16.msra.mxu0 %v469
    %1167 = vmatprep.subr.bf16.mxu0 %v466
    %1168 = vmatpush1.bf16.msra.mxu0 %v465
    %1169 = vmatprep.subr.bf16.mxu0 %v462
    %1170 = vmatpush1.bf16.msra.mxu0 %v461
    %1171 = vmatprep.subr.bf16.mxu0 %v458
    %1172 = vmatpush1.bf16.msra.mxu0 %v457
    %1173 = vmatprep.subr.bf16.mxu0 0
    %1174 = vmatpush2.bf16.msra.mxu0 0
    %1175 = vmatprep.subr.bf16.mxu0 0
    %1176 = vmatpush2.bf16.msra.mxu0 0
    %1177 = vmatprep.subr.bf16.mxu0 0
    %1178 = vmatpush2.bf16.msra.mxu0 0
    %1179 = vmatprep.subr.bf16.mxu0 0
    %1180 = vmatpush2.bf16.msra.mxu0 0
    %1181 = vmatprep.subr.bf16.mxu0 0
    %1182 = vmatpush2.bf16.msra.mxu0 0
    %1183 = vmatprep.subr.bf16.mxu0 0
    %1184 = vmatpush2.bf16.msra.mxu0 0
    %1185 = vmatprep.subr.bf16.mxu0 0
    %1186 = vmatpush2.bf16.msra.mxu0 0
    %1187 = vmatprep.subr.bf16.mxu0 0
    %1188 = vmatpush2.bf16.msra.mxu0 0
    %1189 = vmatprep.mubr.bf16.mxu0 0
    %1190 = vmatmul.mubr.bf16.gmra.mxu0 %v1156
    %v1191 = vpop.f32.mrf.mxu0
    %v1192 = vadd.f32 0.0, %v1191
    %v1193 = vpop.f32.mrf.mxu0
    %v1194 = vadd.f32 0.0, %v1193
    %v1195 = vpop.f32.mrf.mxu0
    %v1196 = vpop.f32.mrf.mxu0
    %1197 = vdwg.mxu0
    %1198 = vmatprep.subr.bf16.mxu0 %v488
    %1199 = vmatpush1.bf16.msra.mxu0 %v487
    %1200 = vmatprep.subr.bf16.mxu0 %v484
    %1201 = vmatpush1.bf16.msra.mxu0 %v483
    %1202 = vmatprep.subr.bf16.mxu0 %v480
    %1203 = vmatpush1.bf16.msra.mxu0 %v479
    %1204 = vmatprep.subr.bf16.mxu0 %v476
    %1205 = vmatpush1.bf16.msra.mxu0 %v475
    %1206 = vmatprep.subr.bf16.mxu0 %v472
    %1207 = vmatpush1.bf16.msra.mxu0 %v471
    %1208 = vmatprep.subr.bf16.mxu0 %v468
    %1209 = vmatpush1.bf16.msra.mxu0 %v467
    %1210 = vmatprep.subr.bf16.mxu0 %v464
    %1211 = vmatpush1.bf16.msra.mxu0 %v463
    %1212 = vmatprep.subr.bf16.mxu0 %v460
    %1213 = vmatpush1.bf16.msra.mxu0 %v459
    %1214 = vmatprep.subr.bf16.mxu0 0
    %1215 = vmatpush2.bf16.msra.mxu0 0
    %1216 = vmatprep.subr.bf16.mxu0 0
    %1217 = vmatpush2.bf16.msra.mxu0 0
    %1218 = vmatprep.subr.bf16.mxu0 0
    %1219 = vmatpush2.bf16.msra.mxu0 0
    %1220 = vmatprep.subr.bf16.mxu0 0
    %1221 = vmatpush2.bf16.msra.mxu0 0
    %1222 = vmatprep.subr.bf16.mxu0 0
    %1223 = vmatpush2.bf16.msra.mxu0 0
    %1224 = vmatprep.subr.bf16.mxu0 0
    %1225 = vmatpush2.bf16.msra.mxu0 0
    %1226 = vmatprep.subr.bf16.mxu0 0
    %1227 = vmatpush2.bf16.msra.mxu0 0
    %1228 = vmatprep.subr.bf16.mxu0 0
    %1229 = vmatpush2.bf16.msra.mxu0 0
    %1230 = vmatprep.mubr.bf16.mxu0 0
    %1231 = vmatmul.mubr.bf16.gmra.mxu0 %v1156
    %v1232 = vpop.f32.mrf.mxu0
    %v1233 = vadd.f32 0.0, %v1232
    %v1234 = vpop.f32.mrf.mxu0
    %v1235 = vadd.f32 0.0, %v1234
    %v1236 = vpop.f32.mrf.mxu0
    %v1237 = vpop.f32.mrf.mxu0
    %1238 = vdwg.mxu0
    %v1239 = vadd.f32 %v1152, %v1192
    %v1240 = vadd.f32 %v1153, %v1194
    %v1241 = vadd.f32 %v1154, %v1233
    %v1242 = vadd.f32 %v1155, %v1235
    %v1243 = vtanh.pop %v1239
    %v1244 = vtanh.pop %v1240
    %v1245 = vtanh.pop %v1241
    %v1246 = vtanh.pop %v1242
    %v1247 = vmul.f32 %v1243, 0.5
    %v1248 = vmul.f32 %v1244, 0.5
    %v1249 = vmul.f32 %v1246, 0.5
    %v1250 = vadd.f32 %v1247, 0.5
    %v1251 = vadd.f32 %v1248, 0.5
    %v1252 = vadd.f32 %v1249, 0.5
    %v1253 = vmul.f32 %v1251, %v1149
    %v1254 = vmul.f32 %v1250, %v1245
    %v1255 = vadd.f32 %v1253, %v1254
    %v1256 = vtanh.pop %v1255
    %v1257 = vmul.f32 %v1252, %v1256
    %v1258 = vpack.c.bf16 %v1257, %v1257
    %1259 = vmatprep.subr.bf16.mxu0 %v486
    %1260 = vmatpush1.bf16.msra.mxu0 %v485
    %1261 = vmatprep.subr.bf16.mxu0 %v482
    %1262 = vmatpush1.bf16.msra.mxu0 %v481
    %1263 = vmatprep.subr.bf16.mxu0 %v478
    %1264 = vmatpush1.bf16.msra.mxu0 %v477
    %1265 = vmatprep.subr.bf16.mxu0 %v474
    %1266 = vmatpush1.bf16.msra.mxu0 %v473
    %1267 = vmatprep.subr.bf16.mxu0 %v470
    %1268 = vmatpush1.bf16.msra.mxu0 %v469
    %1269 = vmatprep.subr.bf16.mxu0 %v466
    %1270 = vmatpush1.bf16.msra.mxu0 %v465
    %1271 = vmatprep.subr.bf16.mxu0 %v462
    %1272 = vmatpush1.bf16.msra.mxu0 %v461
    %1273 = vmatprep.subr.bf16.mxu0 %v458
    %1274 = vmatpush1.bf16.msra.mxu0 %v457
    %1275 = vmatprep.subr.bf16.mxu0 0
    %1276 = vmatpush2.bf16.msra.mxu0 0
    %1277 = vmatprep.subr.bf16.mxu0 0
    %1278 = vmatpush2.bf16.msra.mxu0 0
    %1279 = vmatprep.subr.bf16.mxu0 0
    %1280 = vmatpush2.bf16.msra.mxu0 0
    %1281 = vmatprep.subr.bf16.mxu0 0
    %1282 = vmatpush2.bf16.msra.mxu0 0
    %1283 = vmatprep.subr.bf16.mxu0 0
    %1284 = vmatpush2.bf16.msra.mxu0 0
    %1285 = vmatprep.subr.bf16.mxu0 0
    %1286 = vmatpush2.bf16.msra.mxu0 0
    %1287 = vmatprep.subr.bf16.mxu0 0
    %1288 = vmatpush2.bf16.msra.mxu0 0
    %1289 = vmatprep.subr.bf16.mxu0 0
    %1290 = vmatpush2.bf16.msra.mxu0 0
    %1291 = vmatprep.mubr.bf16.mxu0 0
    %1292 = vmatmul.mubr.bf16.gmra.mxu0 %v1258
    %v1293 = vpop.f32.mrf.mxu0
    %v1294 = vadd.f32 0.0, %v1293
    %v1295 = vpop.f32.mrf.mxu0
    %v1296 = vadd.f32 0.0, %v1295
    %v1297 = vpop.f32.mrf.mxu0
    %v1298 = vpop.f32.mrf.mxu0
    %1299 = vdwg.mxu0
    %1300 = vmatprep.subr.bf16.mxu0 %v488
    %1301 = vmatpush1.bf16.msra.mxu0 %v487
    %1302 = vmatprep.subr.bf16.mxu0 %v484
    %1303 = vmatpush1.bf16.msra.mxu0 %v483
    %1304 = vmatprep.subr.bf16.mxu0 %v480
    %1305 = vmatpush1.bf16.msra.mxu0 %v479
    %1306 = vmatprep.subr.bf16.mxu0 %v476
    %1307 = vmatpush1.bf16.msra.mxu0 %v475
    %1308 = vmatprep.subr.bf16.mxu0 %v472
    %1309 = vmatpush1.bf16.msra.mxu0 %v471
    %1310 = vmatprep.subr.bf16.mxu0 %v468
    %1311 = vmatpush1.bf16.msra.mxu0 %v467
    %1312 = vmatprep.subr.bf16.mxu0 %v464
    %1313 = vmatpush1.bf16.msra.mxu0 %v463
    %1314 = vmatprep.subr.bf16.mxu0 %v460
    %1315 = vmatpush1.bf16.msra.mxu0 %v459
    %1316 = vmatprep.subr.bf16.mxu0 0
    %1317 = vmatpush2.bf16.msra.mxu0 0
    %1318 = vmatprep.subr.bf16.mxu0 0
    %1319 = vmatpush2.bf16.msra.mxu0 0
    %1320 = vmatprep.subr.bf16.mxu0 0
    %1321 = vmatpush2.bf16.msra.mxu0 0
    %1322 = vmatprep.subr.bf16.mxu0 0
    %1323 = vmatpush2.bf16.msra.mxu0 0
    %1324 = vmatprep.subr.bf16.mxu0 0
    %1325 = vmatpush2.bf16.msra.mxu0 0
    %1326 = vmatprep.subr.bf16.mxu0 0
    %1327 = vmatpush2.bf16.msra.mxu0 0
    %1328 = vmatprep.subr.bf16.mxu0 0
    %1329 = vmatpush2.bf16.msra.mxu0 0
    %1330 = vmatprep.subr.bf16.mxu0 0
    %1331 = vmatpush2.bf16.msra.mxu0 0
    %1332 = vmatprep.mubr.bf16.mxu0 0
    %1333 = vmatmul.mubr.bf16.gmra.mxu0 %v1258
    %v1334 = vpop.f32.mrf.mxu0
    %v1335 = vadd.f32 0.0, %v1334
    %v1336 = vpop.f32.mrf.mxu0
    %v1337 = vadd.f32 0.0, %v1336
    %v1338 = vpop.f32.mrf.mxu0
    %v1339 = vpop.f32.mrf.mxu0
    %1340 = vdwg.mxu0
    %v1341 = vadd.f32 %v55, %v1294
    %v1342 = vadd.f32 %v59, %v1296
    %v1343 = vadd.f32 %v63, %v1335
    %v1344 = vadd.f32 %v67, %v1337
    %v1345 = vtanh.pop %v1341
    %v1346 = vtanh.pop %v1342
    %v1347 = vtanh.pop %v1343
    %v1348 = vtanh.pop %v1344
    %v1349 = vmul.f32 %v1345, 0.5
    %v1350 = vmul.f32 %v1346, 0.5
    %v1351 = vmul.f32 %v1348, 0.5
    %v1352 = vadd.f32 %v1349, 0.5
    %v1353 = vadd.f32 %v1350, 0.5
    %v1354 = vadd.f32 %v1351, 0.5
    %v1355 = vmul.f32 %v1353, %v1255
    %v1356 = vmul.f32 %v1352, %v1347
    %v1357 = vadd.f32 %v1355, %v1356
    %v1358 = vtanh.pop %v1357
    %v1359 = vmul.f32 %v1354, %v1358
    %v1360 = vld [vmem:[%s4] sm:$0x1]
    %v1362 = vlaneseq
    %v1363 = vshrl.u32 %v1362, 7
    %v1364 = vsub.s32 0, %v1363
    %v1365 = vrot.slane %v1360, %v1364
    %v1367 = vmul.f32 %v1359, %v1365
    %1368 = vadd.xlane.f32.xlu0 %v1367
    %v1369 = vpop.xlane.xlu0 %1368
    %v1370 = vld [vmem:[#allocation3] sm:$0x1]
    %v1372 = vlaneseq
    %v1373 = vshrl.u32 %v1372, 7
    %v1374 = vsub.s32 0, %v1373
    %v1375 = vrot.slane %v1370, %v1374
    %v1377 = vadd.f32 %v1369, %v1375
    %vm1378 = vcmask 7168
    %1379 = vst.msk [vmem:[%s6] sm:$0xff] %vm1378, %v1377
    // Predicated region
    $region30: #{tpu_custom_call.1} parent=1 // pred_check
      _
    $region31: #{tpu_custom_call.1} parent=1 // pred_check_branch
      %1381 = sbr.rel (0) target = $region33
    $region32: #{tpu_custom_call.1} parent=1 // pred_region
      _
    $region33: #{tpu_custom_call.1} parent=1 // pred_fallthru
      _
    // Predicated region
    $region34: #{tpu_custom_call.1} parent=1 // pred_check
      _
    $region35: #{tpu_custom_call.1} parent=1 // pred_check_branch
      %1383 = sbr.rel (0) target = $region37
    $region36: #{tpu_custom_call.1} parent=1 // pred_region
      _
    $region37: #{tpu_custom_call.1} parent=1 // pred_fallthru
      _
    %1384 = vsyncpa [#allocation5], 1

</llo_original>
